<compile_context>
chip_gen: v5e
topology: v5e:2x2
jax: 0.10.0
libtpu: 0.0.40
codegen_flags: <defaults>
</compile_context>

<pallas_src>
import functools

import jax
import jax.numpy as jnp
from jax.experimental import pallas as pl
from jax.experimental.pallas import tpu as pltpu

# ---- module hyper-parameters (conv1d_1, conv1d_2, maxpool1d_1, maxpool1d_2) ----
C_IN = 4          # conv1d_1.in_channels
C1 = 32           # conv1d_1.out_channels
C2 = 100          # conv1d_2.out_channels
K1 = 3            # conv1d_1.kernel_size
K2 = 3            # conv1d_2.kernel_size
MP1_K, MP1_S = 3, 2   # maxpool1d_1
MP2_K, MP2_S = 2, 2   # maxpool1d_2
FC1_SIZE = 1500   # hard-coded in the module; matches Z flatten for len(concat)=67
FC2_SIZE = 1000   # Y flatten size for hidden length 50
CPAD = 128        # lane-padded channel width used inside the kernel


# ----------------------------- fused Pallas kernel -----------------------------
def _fused_kernel(lhs1_ref, w1_ref, b1_ref, w2_ref, b2_ref,
                  fcw1_ref, fcw2_ref, fcb1_ref, fcb2_ref,
                  o_ref, c1_ref, lhs2_ref, c2_ref, *, B, LZ1, LY1):
    """Whole Conv forward for all batches & both towers in one kernel.

    lhs1_ref : (B*(LZ1+LY1), K1*C_IN)  conv1 im2col rows (Z segments then Y)
    w1_ref   : (K1*C_IN, CPAD)         conv1 weights, lanes padded to 128
    b1_ref   : (1, CPAD)
    w2_ref   : (K2*CPAD, CPAD)         conv2 weights, both dims padded to 128
    b2_ref   : (1, CPAD)
    fcw1_ref : (LZ2P, CPAD)            fc1 weight laid out as [pos, channel]
    fcw2_ref : (LY2P, CPAD)
    fcb*_ref : (1, 1)
    o_ref    : (B, 1)
    c1_ref   : VMEM scratch, conv1+relu output  (rows = all segments packed)
    lhs2_ref : VMEM scratch, conv2 im2col matrix
    c2_ref   : VMEM scratch, conv2 output
    """
    # ---- conv1: one MXU matmul for all batches & both towers, + bias + ReLU ----
    a1 = jnp.dot(lhs1_ref[...], w1_ref[...], preferred_element_type=jnp.float32)
    c1_ref[...] = jnp.maximum(a1 + b1_ref[...], 0.0)

    seg1 = [LZ1] * B + [LY1] * B   # conv1-output segment lengths, packed in order

    def pool(ref, off, L_in, k, s):
        # MaxPool1d over the (sublane) position axis of one packed segment.
        # Max index touched = off + (k-1) + s*((L_in-k)//s) <= off + L_in - 1,
        # i.e. always inside the segment.
        L_p = (L_in - k) // s + 1
        p = ref[pl.ds(off, L_p, stride=s), :]
        for w in range(1, k):
            p = jnp.maximum(p, ref[pl.ds(off + w, L_p, stride=s), :])
        return p, L_p

    # ---- maxpool1 + conv2 im2col assembled directly into VMEM scratch ----
    off1 = 0
    off2 = 0
    seg2 = []
    for L_c1 in seg1:
        p1, L_p1 = pool(c1_ref, off1, L_c1, MP1_K, MP1_S)
        off1 += L_c1
        L_c2 = L_p1 - K2 + 1
        for t in range(K2):  # lane blocks are 128-aligned; sublane offsets masked
            lhs2_ref[pl.ds(off2, L_c2), pl.ds(t * CPAD, CPAD)] = p1[t:t + L_c2, :]
        seg2.append(L_c2)
        off2 += L_c2

    # ---- conv2: one MXU matmul for everything, + bias (no ReLU in the module) ----
    a2 = jnp.dot(lhs2_ref[...], w2_ref[...], preferred_element_type=jnp.float32)
    c2_ref[...] = a2 + b2_ref[...]

    # ---- maxpool2 ----
    pooled = []
    off = 0
    for L_c2 in seg2:
        p2, _ = pool(c2_ref, off, L_c2, MP2_K, MP2_S)
        off += L_c2
        pooled.append(p2)           # Z segments first (B of them), then Y segments

    # ---- fc1(Z) * fc2(Y) head as VPU multiply + reductions, then sigmoid ----
    fw1 = fcw1_ref[...]             # (LZ2P, CPAD); padded lanes are zero
    fw2 = fcw2_ref[...]             # (LY2P, CPAD)
    for b in range(B):
        zdot = jnp.sum(jnp.sum(pooled[b] * fw1, axis=0, keepdims=True),
                       axis=1, keepdims=True) + fcb1_ref[...]        # (1, 1)
        ydot = jnp.sum(jnp.sum(pooled[B + b] * fw2, axis=0, keepdims=True),
                       axis=1, keepdims=True) + fcb2_ref[...]        # (1, 1)
        r = zdot * ydot
        # TODO(synk): nn.Dropout(p=0.2) omitted -> eval/inference semantics (identity).
        pos = 1.0 / (1.0 + jnp.exp(-jnp.abs(r)))   # numerically stable sigmoid
        o_ref[pl.ds(b, 1), :] = jnp.where(r >= 0.0, pos, 1.0 - pos)


# ------------------------------ forward pass ----------------------------------
def conv_forward(hidden, x, params):
    C1n, C_in, K1n = params["conv1_w"].shape        # (32, 4, 3)
    C2n, C1b, K2n = params["conv2_w"].shape         # (100, 32, 3)
    assert (C_in, K1n, K2n, C1b) == (C_IN, K1, K2, C1n)

    B = hidden.shape[0] // C_in
    H = hidden.shape[1]
    L_concat = H + x.shape[1]

    # Static shape bookkeeping (conv stride 1 / no pad, floor-mode pooling).
    LZ1, LY1 = L_concat - K1 + 1, H - K1 + 1
    LZ1P, LY1P = (LZ1 - MP1_K) // MP1_S + 1, (LY1 - MP1_K) // MP1_S + 1
    LZ2, LY2 = LZ1P - K2 + 1, LY1P - K2 + 1
    LZ2P, LY2P = (LZ2 - MP2_K) // MP2_S + 1, (LY2 - MP2_K) // MP2_S + 1
    n_c1 = B * (LZ1 + LY1)
    n_c2 = B * (LZ2 + LY2)
    assert params["fc1_w"].shape[1] == C2n * LZ2P
    assert params["fc2_w"].shape[1] == C2n * LY2P

    # ---- conv1 im2col rows, built on the XLA side (tiny; fuses to one copy) ----
    # Row order: (batch, position); column order: (tap, in_channel).
    def im2col_rows(mat, K):
        L_out = mat.shape[1] - K + 1
        taps = jnp.stack([mat[:, t:t + L_out] for t in range(K)], axis=0)  # (K, B*C_in, L)
        taps = taps.reshape(K, B, C_in, L_out)
        return jnp.transpose(taps, (1, 3, 0, 2)).reshape(B * L_out, K * C_in)

    concat = jnp.concatenate([hidden, x], axis=1)                      # torch.cat(dim=1)
    lhs1 = jnp.concatenate([im2col_rows(concat, K1),                   # Z segments
                            im2col_rows(hidden, K1)], axis=0)          # Y segments

    # ---- weights repacked to matmul-friendly, 128-lane zero-padded layouts ----
    w1m = jnp.transpose(params["conv1_w"], (2, 1, 0)).reshape(K1 * C_in, C1n)
    w1m = jnp.pad(w1m, ((0, 0), (0, CPAD - C1n)))                      # (12, 128)
    b1m = jnp.pad(params["conv1_b"][None, :], ((0, 0), (0, CPAD - C1n)))
    w2m = jnp.pad(jnp.transpose(params["conv2_w"], (2, 1, 0)),         # (K2, C1, C2)
                  ((0, 0), (0, CPAD - C1n), (0, CPAD - C2n))).reshape(K2 * CPAD, CPAD)
    b2m = jnp.pad(params["conv2_b"][None, :], ((0, 0), (0, CPAD - C2n)))
    # fc weights reordered to [position, channel] so the in-kernel reduction
    # matches torch's channel-major flatten of Z.view(-1, C*L).
    fcw1 = jnp.pad(params["fc1_w"].reshape(C2n, LZ2P).T, ((0, 0), (0, CPAD - C2n)))
    fcw2 = jnp.pad(params["fc2_w"].reshape(C2n, LY2P).T, ((0, 0), (0, CPAD - C2n)))
    fcb1 = params["fc1_b"].reshape(1, 1).astype(jnp.float32)
    fcb2 = params["fc2_b"].reshape(1, 1).astype(jnp.float32)

    args = (lhs1, w1m, b1m, w2m, b2m, fcw1, fcw2, fcb1, fcb2)

    def full(a):
        return pl.BlockSpec(a.shape, lambda i, n=a.ndim: (0,) * n)

    kernel = functools.partial(_fused_kernel, B=B, LZ1=LZ1, LY1=LY1)
    out = pl.pallas_call(
        kernel,
        out_shape=jax.ShapeDtypeStruct((B, 1), jnp.float32),
        grid=(1,),
        in_specs=[full(a) for a in args],
        out_specs=pl.BlockSpec((B, 1), lambda i: (0, 0)),
        scratch_shapes=[
            pltpu.VMEM((n_c1, CPAD), jnp.float32),        # conv1 + ReLU output
            pltpu.VMEM((n_c2, K2 * CPAD), jnp.float32),   # conv2 im2col matrix
            pltpu.VMEM((n_c2, CPAD), jnp.float32),        # conv2 output
        ],
        compiler_params=pltpu.CompilerParams(
            dimension_semantics=("arbitrary",)),
    )(*args)
    return out.reshape(-1)     # torch.flatten


# ---------------------------------- main ---------------------------------------
if __name__ == "__main__":
    key = jax.random.PRNGKey(0)
    ks = jax.random.split(key, 10)

    rows, hidden_dim, x_dim = 8, 50, 17   # concat length = 67 -> Z flatten = 1500
    hidden = jax.random.normal(ks[0], (rows, hidden_dim), jnp.float32)
    x = jax.random.normal(ks[1], (rows, x_dim), jnp.float32)

    # Deterministic synthetic parameters in PyTorch layouts:
    #   Conv1d.weight: (C_out, C_in, K), Linear.weight: (1, F)
    params = {
        "conv1_w": 0.2 * jax.random.normal(ks[2], (C1, C_IN, K1), jnp.float32),
        "conv1_b": 0.1 * jax.random.normal(ks[3], (C1,), jnp.float32),
        "conv2_w": 0.2 * jax.random.normal(ks[4], (C2, C1, K2), jnp.float32),
        "conv2_b": 0.1 * jax.random.normal(ks[5], (C2,), jnp.float32),
        "fc1_w": 0.05 * jax.random.normal(ks[6], (1, FC1_SIZE), jnp.float32),
        "fc1_b": 0.1 * jax.random.normal(ks[7], (1,), jnp.float32),
        "fc2_w": 0.05 * jax.random.normal(ks[8], (1, FC2_SIZE), jnp.float32),
        "fc2_b": 0.1 * jax.random.normal(ks[9], (1,), jnp.float32),
    }

    out = jax.jit(conv_forward)(hidden, x, params)
    jax.block_until_ready(out)
    assert out.shape == (rows // C_IN,)
    assert bool(jnp.all(jnp.isfinite(out)))
    assert bool(jnp.all((out > 0.0) & (out < 1.0)))
    print("KERNEL_OK")
</pallas_src>

<mosaic_0001>
module attributes {stable_mosaic.version = 11 : i64} {
  func.func @_fused_kernel(%arg0: i32, %arg1: memref<226x12xf32, #tpu.memory_space<vmem>>, %arg2: memref<12x128xf32, #tpu.memory_space<vmem>>, %arg3: memref<1x128xf32, #tpu.memory_space<vmem>>, %arg4: memref<384x128xf32, #tpu.memory_space<vmem>>, %arg5: memref<1x128xf32, #tpu.memory_space<vmem>>, %arg6: memref<15x128xf32, #tpu.memory_space<vmem>>, %arg7: memref<10x128xf32, #tpu.memory_space<vmem>>, %arg8: memref<1x1xf32, #tpu.memory_space<vmem>>, %arg9: memref<1x1xf32, #tpu.memory_space<vmem>>, %arg10: memref<2x1xf32, #tpu.memory_space<vmem>>, %arg11: memref<226x128xf32, #tpu.memory_space<vmem>>, %arg12: memref<102x384xf32, #tpu.memory_space<vmem>>, %arg13: memref<102x128xf32, #tpu.memory_space<vmem>>) attributes {dimension_semantics = [#tpu.dimension_semantics<arbitrary>], iteration_bounds = array<i64: 1>, scalar_prefetch = 0 : i64, scratch_operands = 3 : i64, tpu.core_type = #tpu.core_type<tc>, window_params = [{pipeline_mode = #tpu.pipeline_mode<synchronous>, transform_indices = @transform_0, window_bounds = array<i64: 226, 12>}, {pipeline_mode = #tpu.pipeline_mode<synchronous>, transform_indices = @transform_1, window_bounds = array<i64: 12, 128>}, {pipeline_mode = #tpu.pipeline_mode<synchronous>, transform_indices = @transform_2, window_bounds = array<i64: 1, 128>}, {pipeline_mode = #tpu.pipeline_mode<synchronous>, transform_indices = @transform_3, window_bounds = array<i64: 384, 128>}, {pipeline_mode = #tpu.pipeline_mode<synchronous>, transform_indices = @transform_4, window_bounds = array<i64: 1, 128>}, {pipeline_mode = #tpu.pipeline_mode<synchronous>, transform_indices = @transform_5, window_bounds = array<i64: 15, 128>}, {pipeline_mode = #tpu.pipeline_mode<synchronous>, transform_indices = @transform_6, window_bounds = array<i64: 10, 128>}, {pipeline_mode = #tpu.pipeline_mode<synchronous>, transform_indices = @transform_7, window_bounds = array<i64: 1, 1>}, {pipeline_mode = #tpu.pipeline_mode<synchronous>, transform_indices = @transform_8, window_bounds = array<i64: 1, 1>}, {pipeline_mode = #tpu.pipeline_mode<synchronous>, transform_indices = @transform_9, window_bounds = array<i64: 2, 1>}]} {
    %c0 = arith.constant 0 : index
    %c0_0 = arith.constant 0 : index
    %0 = vector.load %arg1[%c0, %c0_0] : memref<226x12xf32, #tpu.memory_space<vmem>>, vector<226x12xf32>
    %c0_1 = arith.constant 0 : index
    %c0_2 = arith.constant 0 : index
    %1 = vector.load %arg2[%c0_1, %c0_2] : memref<12x128xf32, #tpu.memory_space<vmem>>, vector<12x128xf32>
    %cst = arith.constant dense<0.000000e+00> : vector<226x128xf32>
    %2 = tpu.matmul %0, %1, %cst {dimension_numbers = #tpu.dot_dimension_numbers<[1], [0], [0], [1], [0, 0, 1, 1], [], []>} : vector<226x12xf32>, vector<12x128xf32>, vector<226x128xf32> -> vector<226x128xf32>
    %c0_3 = arith.constant 0 : index
    %c0_4 = arith.constant 0 : index
    %3 = vector.load %arg3[%c0_3, %c0_4] : memref<1x128xf32, #tpu.memory_space<vmem>>, vector<1x128xf32>
    %4 = vector.broadcast %3 : vector<1x128xf32> to vector<226x128xf32>
    %5 = arith.addf %2, %4 : vector<226x128xf32>
    %cst_5 = arith.constant 0.000000e+00 : f32
    %6 = vector.broadcast %cst_5 : f32 to vector<226x128xf32>
    %7 = arith.maximumf %5, %6 : vector<226x128xf32>
    %c0_6 = arith.constant 0 : index
    %c0_7 = arith.constant 0 : index
    %8 = vector.load %arg11[%c0_6, %c0_7] : memref<226x128xf32, #tpu.memory_space<vmem>>, vector<226x128xf32>
    tpu.vector_store %arg11[%c0_6, %c0_7], %7 {strides = array<i32>} : memref<226x128xf32, #tpu.memory_space<vmem>>, vector<226x128xf32>,
    %c0_8 = arith.constant 0 : index
    %c0_9 = arith.constant 0 : index
    %9 = tpu.strided_load %arg11[%c0_8, %c0_9] {strides = array<i32: 2, 1>} : memref<226x128xf32, #tpu.memory_space<vmem>>, vector<32x128xf32>
    %c1 = arith.constant 1 : index
    %c0_10 = arith.constant 0 : index
    %10 = tpu.strided_load %arg11[%c1, %c0_10] {strides = array<i32: 2, 1>} : memref<226x128xf32, #tpu.memory_space<vmem>>, vector<32x128xf32>
    %11 = arith.maximumf %9, %10 : vector<32x128xf32>
    %c2 = arith.constant 2 : index
    %c0_11 = arith.constant 0 : index
    %12 = tpu.strided_load %arg11[%c2, %c0_11] {strides = array<i32: 2, 1>} : memref<226x128xf32, #tpu.memory_space<vmem>>, vector<32x128xf32>
    %13 = arith.maximumf %11, %12 : vector<32x128xf32>
    %14 = vector.extract_strided_slice %13 {offsets = [0, 0], sizes = [30, 128], strides = [1, 1]} : vector<32x128xf32> to vector<30x128xf32>
    %c0_12 = arith.constant 0 : index
    %c0_13 = arith.constant 0 : index
    %15 = vector.load %arg12[%c0_12, %c0_13] : memref<102x384xf32, #tpu.memory_space<vmem>>, vector<30x128xf32>
    tpu.vector_store %arg12[%c0_12, %c0_13], %14 {strides = array<i32>} : memref<102x384xf32, #tpu.memory_space<vmem>>, vector<30x128xf32>,
    %16 = vector.extract_strided_slice %13 {offsets = [1, 0], sizes = [30, 128], strides = [1, 1]} : vector<32x128xf32> to vector<30x128xf32>
    %c0_14 = arith.constant 0 : index
    %c128 = arith.constant 128 : index
    %17 = vector.load %arg12[%c0_14, %c128] : memref<102x384xf32, #tpu.memory_space<vmem>>, vector<30x128xf32>
    tpu.vector_store %arg12[%c0_14, %c128], %16 {strides = array<i32>} : memref<102x384xf32, #tpu.memory_space<vmem>>, vector<30x128xf32>,
    %18 = vector.extract_strided_slice %13 {offsets = [2, 0], sizes = [30, 128], strides = [1, 1]} : vector<32x128xf32> to vector<30x128xf32>
    %c0_15 = arith.constant 0 : index
    %c256 = arith.constant 256 : index
    %19 = vector.load %arg12[%c0_15, %c256] : memref<102x384xf32, #tpu.memory_space<vmem>>, vector<30x128xf32>
    tpu.vector_store %arg12[%c0_15, %c256], %18 {strides = array<i32>} : memref<102x384xf32, #tpu.memory_space<vmem>>, vector<30x128xf32>,
    %c65 = arith.constant 65 : index
    %c0_16 = arith.constant 0 : index
    %20 = tpu.strided_load %arg11[%c65, %c0_16] {strides = array<i32: 2, 1>} : memref<226x128xf32, #tpu.memory_space<vmem>>, vector<32x128xf32>
    %c66 = arith.constant 66 : index
    %c0_17 = arith.constant 0 : index
    %21 = tpu.strided_load %arg11[%c66, %c0_17] {strides = array<i32: 2, 1>} : memref<226x128xf32, #tpu.memory_space<vmem>>, vector<32x128xf32>
    %22 = arith.maximumf %20, %21 : vector<32x128xf32>
    %c67 = arith.constant 67 : index
    %c0_18 = arith.constant 0 : index
    %23 = tpu.strided_load %arg11[%c67, %c0_18] {strides = array<i32: 2, 1>} : memref<226x128xf32, #tpu.memory_space<vmem>>, vector<32x128xf32>
    %24 = arith.maximumf %22, %23 : vector<32x128xf32>
    %25 = vector.extract_strided_slice %24 {offsets = [0, 0], sizes = [30, 128], strides = [1, 1]} : vector<32x128xf32> to vector<30x128xf32>
    %c30 = arith.constant 30 : index
    %c0_19 = arith.constant 0 : index
    %26 = vector.load %arg12[%c30, %c0_19] : memref<102x384xf32, #tpu.memory_space<vmem>>, vector<30x128xf32>
    tpu.vector_store %arg12[%c30, %c0_19], %25 {strides = array<i32>} : memref<102x384xf32, #tpu.memory_space<vmem>>, vector<30x128xf32>,
    %27 = vector.extract_strided_slice %24 {offsets = [1, 0], sizes = [30, 128], strides = [1, 1]} : vector<32x128xf32> to vector<30x128xf32>
    %c30_20 = arith.constant 30 : index
    %c128_21 = arith.constant 128 : index
    %28 = vector.load %arg12[%c30_20, %c128_21] : memref<102x384xf32, #tpu.memory_space<vmem>>, vector<30x128xf32>
    tpu.vector_store %arg12[%c30_20, %c128_21], %27 {strides = array<i32>} : memref<102x384xf32, #tpu.memory_space<vmem>>, vector<30x128xf32>,
    %29 = vector.extract_strided_slice %24 {offsets = [2, 0], sizes = [30, 128], strides = [1, 1]} : vector<32x128xf32> to vector<30x128xf32>
    %c30_22 = arith.constant 30 : index
    %c256_23 = arith.constant 256 : index
    %30 = vector.load %arg12[%c30_22, %c256_23] : memref<102x384xf32, #tpu.memory_space<vmem>>, vector<30x128xf32>
    tpu.vector_store %arg12[%c30_22, %c256_23], %29 {strides = array<i32>} : memref<102x384xf32, #tpu.memory_space<vmem>>, vector<30x128xf32>,
    %c130 = arith.constant 130 : index
    %c0_24 = arith.constant 0 : index
    %31 = tpu.strided_load %arg11[%c130, %c0_24] {strides = array<i32: 2, 1>} : memref<226x128xf32, #tpu.memory_space<vmem>>, vector<23x128xf32>
    %c131 = arith.constant 131 : index
    %c0_25 = arith.constant 0 : index
    %32 = tpu.strided_load %arg11[%c131, %c0_25] {strides = array<i32: 2, 1>} : memref<226x128xf32, #tpu.memory_space<vmem>>, vector<23x128xf32>
    %33 = arith.maximumf %31, %32 : vector<23x128xf32>
    %c132 = arith.constant 132 : index
    %c0_26 = arith.constant 0 : index
    %34 = tpu.strided_load %arg11[%c132, %c0_26] {strides = array<i32: 2, 1>} : memref<226x128xf32, #tpu.memory_space<vmem>>, vector<23x128xf32>
    %35 = arith.maximumf %33, %34 : vector<23x128xf32>
    %36 = vector.extract_strided_slice %35 {offsets = [0, 0], sizes = [21, 128], strides = [1, 1]} : vector<23x128xf32> to vector<21x128xf32>
    %c60 = arith.constant 60 : index
    %c0_27 = arith.constant 0 : index
    %37 = vector.load %arg12[%c60, %c0_27] : memref<102x384xf32, #tpu.memory_space<vmem>>, vector<21x128xf32>
    tpu.vector_store %arg12[%c60, %c0_27], %36 {strides = array<i32>} : memref<102x384xf32, #tpu.memory_space<vmem>>, vector<21x128xf32>,
    %38 = vector.extract_strided_slice %35 {offsets = [1, 0], sizes = [21, 128], strides = [1, 1]} : vector<23x128xf32> to vector<21x128xf32>
    %c60_28 = arith.constant 60 : index
    %c128_29 = arith.constant 128 : index
    %39 = vector.load %arg12[%c60_28, %c128_29] : memref<102x384xf32, #tpu.memory_space<vmem>>, vector<21x128xf32>
    tpu.vector_store %arg12[%c60_28, %c128_29], %38 {strides = array<i32>} : memref<102x384xf32, #tpu.memory_space<vmem>>, vector<21x128xf32>,
    %40 = vector.extract_strided_slice %35 {offsets = [2, 0], sizes = [21, 128], strides = [1, 1]} : vector<23x128xf32> to vector<21x128xf32>
    %c60_30 = arith.constant 60 : index
    %c256_31 = arith.constant 256 : index
    %41 = vector.load %arg12[%c60_30, %c256_31] : memref<102x384xf32, #tpu.memory_space<vmem>>, vector<21x128xf32>
    tpu.vector_store %arg12[%c60_30, %c256_31], %40 {strides = array<i32>} : memref<102x384xf32, #tpu.memory_space<vmem>>, vector<21x128xf32>,
    %c178 = arith.constant 178 : index
    %c0_32 = arith.constant 0 : index
    %42 = tpu.strided_load %arg11[%c178, %c0_32] {strides = array<i32: 2, 1>} : memref<226x128xf32, #tpu.memory_space<vmem>>, vector<23x128xf32>
    %c179 = arith.constant 179 : index
    %c0_33 = arith.constant 0 : index
    %43 = tpu.strided_load %arg11[%c179, %c0_33] {strides = array<i32: 2, 1>} : memref<226x128xf32, #tpu.memory_space<vmem>>, vector<23x128xf32>
    %44 = arith.maximumf %42, %43 : vector<23x128xf32>
    %c180 = arith.constant 180 : index
    %c0_34 = arith.constant 0 : index
    %45 = tpu.strided_load %arg11[%c180, %c0_34] {strides = array<i32: 2, 1>} : memref<226x128xf32, #tpu.memory_space<vmem>>, vector<23x128xf32>
    %46 = arith.maximumf %44, %45 : vector<23x128xf32>
    %47 = vector.extract_strided_slice %46 {offsets = [0, 0], sizes = [21, 128], strides = [1, 1]} : vector<23x128xf32> to vector<21x128xf32>
    %c81 = arith.constant 81 : index
    %c0_35 = arith.constant 0 : index
    %48 = vector.load %arg12[%c81, %c0_35] : memref<102x384xf32, #tpu.memory_space<vmem>>, vector<21x128xf32>
    tpu.vector_store %arg12[%c81, %c0_35], %47 {strides = array<i32>} : memref<102x384xf32, #tpu.memory_space<vmem>>, vector<21x128xf32>,
    %49 = vector.extract_strided_slice %46 {offsets = [1, 0], sizes = [21, 128], strides = [1, 1]} : vector<23x128xf32> to vector<21x128xf32>
    %c81_36 = arith.constant 81 : index
    %c128_37 = arith.constant 128 : index
    %50 = vector.load %arg12[%c81_36, %c128_37] : memref<102x384xf32, #tpu.memory_space<vmem>>, vector<21x128xf32>
    tpu.vector_store %arg12[%c81_36, %c128_37], %49 {strides = array<i32>} : memref<102x384xf32, #tpu.memory_space<vmem>>, vector<21x128xf32>,
    %51 = vector.extract_strided_slice %46 {offsets = [2, 0], sizes = [21, 128], strides = [1, 1]} : vector<23x128xf32> to vector<21x128xf32>
    %c81_38 = arith.constant 81 : index
    %c256_39 = arith.constant 256 : index
    %52 = vector.load %arg12[%c81_38, %c256_39] : memref<102x384xf32, #tpu.memory_space<vmem>>, vector<21x128xf32>
    tpu.vector_store %arg12[%c81_38, %c256_39], %51 {strides = array<i32>} : memref<102x384xf32, #tpu.memory_space<vmem>>, vector<21x128xf32>,
    %c0_40 = arith.constant 0 : index
    %c0_41 = arith.constant 0 : index
    %53 = vector.load %arg12[%c0_40, %c0_41] : memref<102x384xf32, #tpu.memory_space<vmem>>, vector<102x384xf32>
    %c0_42 = arith.constant 0 : index
    %c0_43 = arith.constant 0 : index
    %54 = vector.load %arg4[%c0_42, %c0_43] : memref<384x128xf32, #tpu.memory_space<vmem>>, vector<384x128xf32>
    %cst_44 = arith.constant dense<0.000000e+00> : vector<102x128xf32>
    %55 = tpu.matmul %53, %54, %cst_44 {dimension_numbers = #tpu.dot_dimension_numbers<[1], [0], [0], [1], [0, 0, 1, 1], [], []>} : vector<102x384xf32>, vector<384x128xf32>, vector<102x128xf32> -> vector<102x128xf32>
    %c0_45 = arith.constant 0 : index
    %c0_46 = arith.constant 0 : index
    %56 = vector.load %arg5[%c0_45, %c0_46] : memref<1x128xf32, #tpu.memory_space<vmem>>, vector<1x128xf32>
    %57 = vector.broadcast %56 : vector<1x128xf32> to vector<102x128xf32>
    %58 = arith.addf %55, %57 : vector<102x128xf32>
    %c0_47 = arith.constant 0 : index
    %c0_48 = arith.constant 0 : index
    %59 = vector.load %arg13[%c0_47, %c0_48] : memref<102x128xf32, #tpu.memory_space<vmem>>, vector<102x128xf32>
    tpu.vector_store %arg13[%c0_47, %c0_48], %58 {strides = array<i32>} : memref<102x128xf32, #tpu.memory_space<vmem>>, vector<102x128xf32>,
    %c0_49 = arith.constant 0 : index
    %c0_50 = arith.constant 0 : index
    %60 = tpu.strided_load %arg13[%c0_49, %c0_50] {strides = array<i32: 2, 1>} : memref<102x128xf32, #tpu.memory_space<vmem>>, vector<15x128xf32>
    %c1_51 = arith.constant 1 : index
    %c0_52 = arith.constant 0 : index
    %61 = tpu.strided_load %arg13[%c1_51, %c0_52] {strides = array<i32: 2, 1>} : memref<102x128xf32, #tpu.memory_space<vmem>>, vector<15x128xf32>
    %62 = arith.maximumf %60, %61 : vector<15x128xf32>
    %c30_53 = arith.constant 30 : index
    %c0_54 = arith.constant 0 : index
    %63 = tpu.strided_load %arg13[%c30_53, %c0_54] {strides = array<i32: 2, 1>} : memref<102x128xf32, #tpu.memory_space<vmem>>, vector<15x128xf32>
    %c31 = arith.constant 31 : index
    %c0_55 = arith.constant 0 : index
    %64 = tpu.strided_load %arg13[%c31, %c0_55] {strides = array<i32: 2, 1>} : memref<102x128xf32, #tpu.memory_space<vmem>>, vector<15x128xf32>
    %65 = arith.maximumf %63, %64 : vector<15x128xf32>
    %c60_56 = arith.constant 60 : index
    %c0_57 = arith.constant 0 : index
    %66 = tpu.strided_load %arg13[%c60_56, %c0_57] {strides = array<i32: 2, 1>} : memref<102x128xf32, #tpu.memory_space<vmem>>, vector<10x128xf32>
    %c61 = arith.constant 61 : index
    %c0_58 = arith.constant 0 : index
    %67 = tpu.strided_load %arg13[%c61, %c0_58] {strides = array<i32: 2, 1>} : memref<102x128xf32, #tpu.memory_space<vmem>>, vector<10x128xf32>
    %68 = arith.maximumf %66, %67 : vector<10x128xf32>
    %c81_59 = arith.constant 81 : index
    %c0_60 = arith.constant 0 : index
    %69 = tpu.strided_load %arg13[%c81_59, %c0_60] {strides = array<i32: 2, 1>} : memref<102x128xf32, #tpu.memory_space<vmem>>, vector<10x128xf32>
    %c82 = arith.constant 82 : index
    %c0_61 = arith.constant 0 : index
    %70 = tpu.strided_load %arg13[%c82, %c0_61] {strides = array<i32: 2, 1>} : memref<102x128xf32, #tpu.memory_space<vmem>>, vector<10x128xf32>
    %71 = arith.maximumf %69, %70 : vector<10x128xf32>
    %c0_62 = arith.constant 0 : index
    %c0_63 = arith.constant 0 : index
    %72 = vector.load %arg6[%c0_62, %c0_63] : memref<15x128xf32, #tpu.memory_space<vmem>>, vector<15x128xf32>
    %c0_64 = arith.constant 0 : index
    %c0_65 = arith.constant 0 : index
    %73 = vector.load %arg7[%c0_64, %c0_65] : memref<10x128xf32, #tpu.memory_space<vmem>>, vector<10x128xf32>
    %74 = arith.mulf %62, %72 : vector<15x128xf32>
    %cst_66 = arith.constant dense<0.000000e+00> : vector<128xf32>
    %75 = vector.multi_reduction <add>, %74, %cst_66 [0] : vector<15x128xf32> to vector<128xf32>
    %76 = vector.shape_cast %75 : vector<128xf32> to vector<1x128xf32>
    %cst_67 = arith.constant dense<0.000000e+00> : vector<1xf32>
    %77 = vector.multi_reduction <add>, %76, %cst_67 [1] : vector<1x128xf32> to vector<1xf32>
    %78 = vector.shape_cast %77 : vector<1xf32> to vector<1x1xf32>
    %c0_68 = arith.constant 0 : index
    %c0_69 = arith.constant 0 : index
    %79 = vector.load %arg8[%c0_68, %c0_69] : memref<1x1xf32, #tpu.memory_space<vmem>>, vector<1x1xf32>
    %80 = arith.addf %78, %79 : vector<1x1xf32>
    %81 = arith.mulf %68, %73 : vector<10x128xf32>
    %cst_70 = arith.constant dense<0.000000e+00> : vector<128xf32>
    %82 = vector.multi_reduction <add>, %81, %cst_70 [0] : vector<10x128xf32> to vector<128xf32>
    %83 = vector.shape_cast %82 : vector<128xf32> to vector<1x128xf32>
    %cst_71 = arith.constant dense<0.000000e+00> : vector<1xf32>
    %84 = vector.multi_reduction <add>, %83, %cst_71 [1] : vector<1x128xf32> to vector<1xf32>
    %85 = vector.shape_cast %84 : vector<1xf32> to vector<1x1xf32>
    %c0_72 = arith.constant 0 : index
    %c0_73 = arith.constant 0 : index
    %86 = vector.load %arg9[%c0_72, %c0_73] : memref<1x1xf32, #tpu.memory_space<vmem>>, vector<1x1xf32>
    %87 = arith.addf %85, %86 : vector<1x1xf32>
    %88 = arith.mulf %80, %87 : vector<1x1xf32>
    %89 = math.absf %88 : vector<1x1xf32>
    %cst_74 = arith.constant 0.000000e+00 : f32
    %90 = vector.broadcast %cst_74 : f32 to vector<1x1xf32>
    %91 = arith.subf %90, %89 : vector<1x1xf32>
    %92 = math.exp %91 : vector<1x1xf32>
    %cst_75 = arith.constant 1.000000e+00 : f32
    %93 = vector.broadcast %cst_75 : f32 to vector<1x1xf32>
    %94 = arith.addf %93, %92 : vector<1x1xf32>
    %cst_76 = arith.constant 1.000000e+00 : f32
    %95 = vector.broadcast %cst_76 : f32 to vector<1x1xf32>
    %96 = arith.divf %95, %94 : vector<1x1xf32>
    %cst_77 = arith.constant 0.000000e+00 : f32
    %97 = vector.broadcast %cst_77 : f32 to vector<1x1xf32>
    %98 = arith.cmpf oge, %88, %97 : vector<1x1xf32>
    %cst_78 = arith.constant 1.000000e+00 : f32
    %99 = vector.broadcast %cst_78 : f32 to vector<1x1xf32>
    %100 = arith.subf %99, %96 : vector<1x1xf32>
    %101 = arith.select %98, %96, %100 : vector<1x1xi1>, vector<1x1xf32>
    %c0_79 = arith.constant 0 : index
    %c0_80 = arith.constant 0 : index
    %102 = vector.load %arg10[%c0_79, %c0_80] : memref<2x1xf32, #tpu.memory_space<vmem>>, vector<1x1xf32>
    tpu.vector_store %arg10[%c0_79, %c0_80], %101 {strides = array<i32>} : memref<2x1xf32, #tpu.memory_space<vmem>>, vector<1x1xf32>,
    %103 = arith.mulf %65, %72 : vector<15x128xf32>
    %cst_81 = arith.constant dense<0.000000e+00> : vector<128xf32>
    %104 = vector.multi_reduction <add>, %103, %cst_81 [0] : vector<15x128xf32> to vector<128xf32>
    %105 = vector.shape_cast %104 : vector<128xf32> to vector<1x128xf32>
    %cst_82 = arith.constant dense<0.000000e+00> : vector<1xf32>
    %106 = vector.multi_reduction <add>, %105, %cst_82 [1] : vector<1x128xf32> to vector<1xf32>
    %107 = vector.shape_cast %106 : vector<1xf32> to vector<1x1xf32>
    %c0_83 = arith.constant 0 : index
    %c0_84 = arith.constant 0 : index
    %108 = vector.load %arg8[%c0_83, %c0_84] : memref<1x1xf32, #tpu.memory_space<vmem>>, vector<1x1xf32>
    %109 = arith.addf %107, %108 : vector<1x1xf32>
    %110 = arith.mulf %71, %73 : vector<10x128xf32>
    %cst_85 = arith.constant dense<0.000000e+00> : vector<128xf32>
    %111 = vector.multi_reduction <add>, %110, %cst_85 [0] : vector<10x128xf32> to vector<128xf32>
    %112 = vector.shape_cast %111 : vector<128xf32> to vector<1x128xf32>
    %cst_86 = arith.constant dense<0.000000e+00> : vector<1xf32>
    %113 = vector.multi_reduction <add>, %112, %cst_86 [1] : vector<1x128xf32> to vector<1xf32>
    %114 = vector.shape_cast %113 : vector<1xf32> to vector<1x1xf32>
    %c0_87 = arith.constant 0 : index
    %c0_88 = arith.constant 0 : index
    %115 = vector.load %arg9[%c0_87, %c0_88] : memref<1x1xf32, #tpu.memory_space<vmem>>, vector<1x1xf32>
    %116 = arith.addf %114, %115 : vector<1x1xf32>
    %117 = arith.mulf %109, %116 : vector<1x1xf32>
    %118 = math.absf %117 : vector<1x1xf32>
    %cst_89 = arith.constant 0.000000e+00 : f32
    %119 = vector.broadcast %cst_89 : f32 to vector<1x1xf32>
    %120 = arith.subf %119, %118 : vector<1x1xf32>
    %121 = math.exp %120 : vector<1x1xf32>
    %cst_90 = arith.constant 1.000000e+00 : f32
    %122 = vector.broadcast %cst_90 : f32 to vector<1x1xf32>
    %123 = arith.addf %122, %121 : vector<1x1xf32>
    %cst_91 = arith.constant 1.000000e+00 : f32
    %124 = vector.broadcast %cst_91 : f32 to vector<1x1xf32>
    %125 = arith.divf %124, %123 : vector<1x1xf32>
    %cst_92 = arith.constant 0.000000e+00 : f32
    %126 = vector.broadcast %cst_92 : f32 to vector<1x1xf32>
    %127 = arith.cmpf oge, %117, %126 : vector<1x1xf32>
    %cst_93 = arith.constant 1.000000e+00 : f32
    %128 = vector.broadcast %cst_93 : f32 to vector<1x1xf32>
    %129 = arith.subf %128, %125 : vector<1x1xf32>
    %130 = arith.select %127, %125, %129 : vector<1x1xi1>, vector<1x1xf32>
    %c1_94 = arith.constant 1 : index
    %c0_95 = arith.constant 0 : index
    %131 = vector.load %arg10[%c1_94, %c0_95] : memref<2x1xf32, #tpu.memory_space<vmem>>, vector<1x1xf32>
    tpu.vector_store %arg10[%c1_94, %c0_95], %130 {strides = array<i32>} : memref<2x1xf32, #tpu.memory_space<vmem>>, vector<1x1xf32>,
    return
  }
  func.func @transform_0(%arg0: i32) -> (i32, i32) {
    %c0_i32 = arith.constant 0 : i32
    %c0_i32_0 = arith.constant 0 : i32
    %c0_i32_1 = arith.constant 0 : i32
    return %c0_i32, %c0_i32_0 : i32, i32
  }
  func.func @transform_1(%arg0: i32) -> (i32, i32) {
    %c0_i32 = arith.constant 0 : i32
    %c0_i32_0 = arith.constant 0 : i32
    %c0_i32_1 = arith.constant 0 : i32
    return %c0_i32, %c0_i32_0 : i32, i32
  }
  func.func @transform_2(%arg0: i32) -> (i32, i32) {
    %c0_i32 = arith.constant 0 : i32
    %c0_i32_0 = arith.constant 0 : i32
    %c0_i32_1 = arith.constant 0 : i32
    return %c0_i32, %c0_i32_0 : i32, i32
  }
  func.func @transform_3(%arg0: i32) -> (i32, i32) {
    %c0_i32 = arith.constant 0 : i32
    %c0_i32_0 = arith.constant 0 : i32
    %c0_i32_1 = arith.constant 0 : i32
    return %c0_i32, %c0_i32_0 : i32, i32
  }
  func.func @transform_4(%arg0: i32) -> (i32, i32) {
    %c0_i32 = arith.constant 0 : i32
    %c0_i32_0 = arith.constant 0 : i32
    %c0_i32_1 = arith.constant 0 : i32
    return %c0_i32, %c0_i32_0 : i32, i32
  }
  func.func @transform_5(%arg0: i32) -> (i32, i32) {
    %c0_i32 = arith.constant 0 : i32
    %c0_i32_0 = arith.constant 0 : i32
    %c0_i32_1 = arith.constant 0 : i32
    return %c0_i32, %c0_i32_0 : i32, i32
  }
  func.func @transform_6(%arg0: i32) -> (i32, i32) {
    %c0_i32 = arith.constant 0 : i32
    %c0_i32_0 = arith.constant 0 : i32
    %c0_i32_1 = arith.constant 0 : i32
    return %c0_i32, %c0_i32_0 : i32, i32
  }
  func.func @transform_7(%arg0: i32) -> (i32, i32) {
    %c0_i32 = arith.constant 0 : i32
    %c0_i32_0 = arith.constant 0 : i32
    %c0_i32_1 = arith.constant 0 : i32
    return %c0_i32, %c0_i32_0 : i32, i32
  }
  func.func @transform_8(%arg0: i32) -> (i32, i32) {
    %c0_i32 = arith.constant 0 : i32
    %c0_i32_0 = arith.constant 0 : i32
    %c0_i32_1 = arith.constant 0 : i32
    return %c0_i32, %c0_i32_0 : i32, i32
  }
  func.func @transform_9(%arg0: i32) -> (i32, i32) {
    %c0_i32 = arith.constant 0 : i32
    %c0_i32_0 = arith.constant 0 : i32
    %c0_i32_1 = arith.constant 0 : i32
    return %c0_i32, %c0_i32_0 : i32, i32
  }
}

</mosaic_0001>

<llo_original>
// kernel: conv_forward.1
$region0: #{conv_forward.1}
  #allocation0 [shape = 'u32[]', space=smem, size = 0x4, offset = 0x4, fixed_abs, tag = 'smem constant byte address 0x4 - core index']
  #allocation1 [shape = 'u32[72,128]{1,0:T(1,128)}', space=vmem, size = 0x9000, scoped, tag = 'internal scratch']
  #allocation2 [shape = 'f32[226,128]{1,0:T(8,128)}', space=vmem, size = 0x1d000, scoped, tag = 'scratch operand']
  #allocation3 [shape = 'f32[102,384]{1,0:T(8,128)}', space=vmem, size = 0x27000, scoped, tag = 'scratch operand']
  #allocation4 [shape = 'f32[102,128]{1,0:T(8,128)}', space=vmem, size = 0xd000, scoped, tag = 'scratch operand']
  #allocation5 [shape = 'f32[1,1]{1,0:T(1,128)S(1)}', space=vmem, size = 0x200, scoped, tag = 'scoped memory for conv_forward.1']
  #allocation6 [shape = 'f32[1,1]{1,0:T(1,128)S(1)}', space=vmem, size = 0x200, scoped, tag = 'scoped memory for conv_forward.1']
  %s0 = inlined_call_operand.vmem [shape: f32[226,12], index: 0, kind: input, shape index: {}]
  %s1 = inlined_call_operand.vmem [shape: f32[12,128], index: 1, kind: input, shape index: {}]
  %s2 = inlined_call_operand.vmem [shape: f32[1,128], index: 2, kind: input, shape index: {}]
  %s3 = inlined_call_operand.vmem [shape: f32[384,128], index: 3, kind: input, shape index: {}]
  %s4 = inlined_call_operand.vmem [shape: f32[1,128], index: 4, kind: input, shape index: {}]
  %s5 = inlined_call_operand.vmem [shape: f32[15,128], index: 5, kind: input, shape index: {}]
  %s6 = inlined_call_operand.vmem [shape: f32[10,128], index: 6, kind: input, shape index: {}]
  %s7 = inlined_call_operand.<no memory space> [shape: f32[1,1], index: 7, kind: input, shape index: {}]
  %s8 = inlined_call_operand.<no memory space> [shape: f32[1,1], index: 8, kind: input, shape index: {}]
  %s9 = inlined_call_operand.vmem [shape: f32[2,1], index: 9, kind: output, shape index: {}]
  %s10 = sld [smem:[#allocation0]]
  $region46: #{conv_forward.1} parent=0
    _
  %s12 = ssub.s32 1, %s10
  %s13 = scalar_select 0, %s12, %s10
  %v14 = vstv %s7
  %15 = vst [vmem:[#allocation5] sm:$0x1] %v14
  %v16 = vstv %s8
  %17 = vst [vmem:[#allocation6] sm:$0x1] %v16
  // Predicated region
  $region2: #{conv_forward.1} parent=0 // pred_check
    _
  $region3: #{conv_forward.1} parent=0 // pred_check_branch
    %19 = sbr.rel (0) target = $region5
  $region4: #{conv_forward.1} parent=0 // pred_region
    _
  $region5: #{conv_forward.1} parent=0 // pred_fallthru
    _
  // Predicated region
  $region6: #{conv_forward.1} parent=0 // pred_check
    _
  $region7: #{conv_forward.1} parent=0 // pred_check_branch
    %21 = sbr.rel (0) target = $region9
  $region8: #{conv_forward.1} parent=0 // pred_region
    _
  $region9: #{conv_forward.1} parent=0 // pred_fallthru
    _
  // Predicated region
  $region10: #{conv_forward.1} parent=0 // pred_check
    _
  $region11: #{conv_forward.1} parent=0 // pred_check_branch
    %23 = sbr.rel (0) target = $region13
  $region12: #{conv_forward.1} parent=0 // pred_region
    _
  $region13: #{conv_forward.1} parent=0 // pred_fallthru
    _
  // Predicated region
  $region14: #{conv_forward.1} parent=0 // pred_check
    _
  $region15: #{conv_forward.1} parent=0 // pred_check_branch
    %25 = sbr.rel (0) target = $region17
  $region16: #{conv_forward.1} parent=0 // pred_region
    _
  $region17: #{conv_forward.1} parent=0 // pred_fallthru
    _
  // Predicated region
  $region18: #{conv_forward.1} parent=0 // pred_check
    _
  $region19: #{conv_forward.1} parent=0 // pred_check_branch
    %27 = sbr.rel (0) target = $region21
  $region20: #{conv_forward.1} parent=0 // pred_region
    _
  $region21: #{conv_forward.1} parent=0 // pred_fallthru
    _
  // Predicated region
  $region22: #{conv_forward.1} parent=0 // pred_check
    _
  $region23: #{conv_forward.1} parent=0 // pred_check_branch
    %29 = sbr.rel (0) target = $region25
  $region24: #{conv_forward.1} parent=0 // pred_region
    _
  $region25: #{conv_forward.1} parent=0 // pred_fallthru
    _
  // Predicated region
  $region26: #{conv_forward.1} parent=0 // pred_check
    _
  $region27: #{conv_forward.1} parent=0 // pred_check_branch
    %31 = sbr.rel (0) target = $region29
  $region28: #{conv_forward.1} parent=0 // pred_region
    _
  $region29: #{conv_forward.1} parent=0 // pred_fallthru
    _
  // Predicated region
  $region30: #{conv_forward.1} parent=0 // pred_check
    _
  $region31: #{conv_forward.1} parent=0 // pred_check_branch
    %33 = sbr.rel (0) target = $region33
  $region32: #{conv_forward.1} parent=0 // pred_region
    _
  $region33: #{conv_forward.1} parent=0 // pred_fallthru
    _
  // Predicated region
  $region34: #{conv_forward.1} parent=0 // pred_check
    _
  $region35: #{conv_forward.1} parent=0 // pred_check_branch
    %35 = sbr.rel (0) target = $region37
  $region36: #{conv_forward.1} parent=0 // pred_region
    _
  $region37: #{conv_forward.1} parent=0 // pred_fallthru
    _
  %v36 = vld [vmem:[%s0] sm:$0xff]
  %v37 = vld [vmem:[%s0 + $0x8] sm:$0xff]
  %v38 = vld [vmem:[%s0 + $0x10] sm:$0xff]
  %v39 = vld [vmem:[%s0 + $0x18] sm:$0xff]
  %v40 = vld [vmem:[%s0 + $0x20] sm:$0xff]
  %v41 = vld [vmem:[%s0 + $0x28] sm:$0xff]
  %v42 = vld [vmem:[%s0 + $0x30] sm:$0xff]
  %v43 = vld [vmem:[%s0 + $0x38] sm:$0xff]
  %v44 = vld [vmem:[%s0 + $0x40] sm:$0xff]
  %v45 = vld [vmem:[%s0 + $0x48] sm:$0xff]
  %v46 = vld [vmem:[%s0 + $0x50] sm:$0xff]
  %v47 = vld [vmem:[%s0 + $0x58] sm:$0xff]
  %v48 = vld [vmem:[%s0 + $0x60] sm:$0xff]
  %v49 = vld [vmem:[%s0 + $0x68] sm:$0xff]
  %v50 = vld [vmem:[%s0 + $0x70] sm:$0xff]
  %v51 = vld [vmem:[%s0 + $0x78] sm:$0xff]
  %v52 = vld [vmem:[%s0 + $0x80] sm:$0xff]
  %v53 = vld [vmem:[%s0 + $0x88] sm:$0xff]
  %v54 = vld [vmem:[%s0 + $0x90] sm:$0xff]
  %v55 = vld [vmem:[%s0 + $0x98] sm:$0xff]
  %v56 = vld [vmem:[%s0 + $0xa0] sm:$0xff]
  %v57 = vld [vmem:[%s0 + $0xa8] sm:$0xff]
  %v58 = vld [vmem:[%s0 + $0xb0] sm:$0xff]
  %v59 = vld [vmem:[%s0 + $0xb8] sm:$0xff]
  %v60 = vld [vmem:[%s0 + $0xc0] sm:$0xff]
  %v61 = vld [vmem:[%s0 + $0xc8] sm:$0xff]
  %v62 = vld [vmem:[%s0 + $0xd0] sm:$0xff]
  %v63 = vld [vmem:[%s0 + $0xd8] sm:$0xff]
  %v64 = vld [vmem:[%s0 + $0xe0] sm:$0x3]
  %v65 = vld [vmem:[%s1] sm:$0xff]
  %v66 = vld [vmem:[%s1 + $0x8] sm:$0xf]
  %v67 = vld [vmem:[%s2] sm:$0x1]
  %v69 = vperm.slane %v67, 0
  %vm71 = vcmask 97280
  %v73 = vsel %vm71, %v36, 0
  %v76 = vsel %vm71, %v37, 0
  %v79 = vsel %vm71, %v38, 0
  %v82 = vsel %vm71, %v39, 0
  %v85 = vsel %vm71, %v40, 0
  %v88 = vsel %vm71, %v41, 0
  %v91 = vsel %vm71, %v42, 0
  %v94 = vsel %vm71, %v43, 0
  %v97 = vsel %vm71, %v44, 0
  %v100 = vsel %vm71, %v45, 0
  %v103 = vsel %vm71, %v46, 0
  %v106 = vsel %vm71, %v47, 0
  %v109 = vsel %vm71, %v48, 0
  %v112 = vsel %vm71, %v49, 0
  %v115 = vsel %vm71, %v50, 0
  %v118 = vsel %vm71, %v51, 0
  %v121 = vsel %vm71, %v52, 0
  %v124 = vsel %vm71, %v53, 0
  %v127 = vsel %vm71, %v54, 0
  %v130 = vsel %vm71, %v55, 0
  %v133 = vsel %vm71, %v56, 0
  %v136 = vsel %vm71, %v57, 0
  %v139 = vsel %vm71, %v58, 0
  %v142 = vsel %vm71, %v59, 0
  %v145 = vsel %vm71, %v60, 0
  %v148 = vsel %vm71, %v61, 0
  %v151 = vsel %vm71, %v62, 0
  %v154 = vsel %vm71, %v63, 0
  %v157 = vsel %vm71, %v64, 0
  %vm159 = vcmask 1043456
  %v161 = vsel %vm159, %v66, 0
  %163 = vmatpush.msra.mxu0 0.0
  %164 = vmatpush.msra.mxu0 0.0
  %165 = vmatpush.msra.mxu0 0.0
  %166 = vmatpush.msra.mxu0 0.0
  %167 = vmatpush.msra.mxu0 0.0
  %168 = vmatpush.msra.mxu0 0.0
  %169 = vmatpush.msra.mxu0 0.0
  %170 = vmatpush.msra.mxu0 0.0
  %171 = vmatpush.msra.mxu0 0.0
  %172 = vmatpush.msra.mxu0 0.0
  %173 = vmatpush.msra.mxu0 0.0
  %174 = vmatpush.msra.mxu0 0.0
  %175 = vmatpush.msra.mxu0 0.0
  %176 = vmatpush.msra.mxu0 0.0
  %177 = vmatpush.msra.mxu0 %v161
  %178 = vmatpush.msra.mxu0 %v65
  %179 = vmatmul.f32.gmra.mxu0 %v73
  %v180 = vpop.f32.mrf.mxu0
  %v181 = vadd.f32 %v69, %v180
  %182 = vmatmul.f32.gmra.mxu0 %v76
  %v183 = vpop.f32.mrf.mxu0
  %v184 = vadd.f32 %v69, %v183
  %185 = vmatmul.f32.gmra.mxu0 %v79
  %v186 = vpop.f32.mrf.mxu0
  %v187 = vadd.f32 %v69, %v186
  %188 = vmatmul.f32.gmra.mxu0 %v82
  %v189 = vpop.f32.mrf.mxu0
  %v190 = vadd.f32 %v69, %v189
  %191 = vmatmul.f32.gmra.mxu0 %v85
  %v192 = vpop.f32.mrf.mxu0
  %v193 = vadd.f32 %v69, %v192
  %194 = vmatmul.f32.gmra.mxu0 %v88
  %v195 = vpop.f32.mrf.mxu0
  %v196 = vadd.f32 %v69, %v195
  %197 = vmatmul.f32.gmra.mxu0 %v91
  %v198 = vpop.f32.mrf.mxu0
  %v199 = vadd.f32 %v69, %v198
  %200 = vmatmul.f32.gmra.mxu0 %v94
  %v201 = vpop.f32.mrf.mxu0
  %v202 = vadd.f32 %v69, %v201
  %203 = vmatmul.f32.gmra.mxu0 %v97
  %v204 = vpop.f32.mrf.mxu0
  %v205 = vadd.f32 %v69, %v204
  %206 = vmatmul.f32.gmra.mxu0 %v100
  %v207 = vpop.f32.mrf.mxu0
  %v208 = vadd.f32 %v69, %v207
  %209 = vmatmul.f32.gmra.mxu0 %v103
  %v210 = vpop.f32.mrf.mxu0
  %v211 = vadd.f32 %v69, %v210
  %212 = vmatmul.f32.gmra.mxu0 %v106
  %v213 = vpop.f32.mrf.mxu0
  %v214 = vadd.f32 %v69, %v213
  %215 = vmatmul.f32.gmra.mxu0 %v109
  %v216 = vpop.f32.mrf.mxu0
  %v217 = vadd.f32 %v69, %v216
  %218 = vmatmul.f32.gmra.mxu0 %v112
  %v219 = vpop.f32.mrf.mxu0
  %v220 = vadd.f32 %v69, %v219
  %221 = vmatmul.f32.gmra.mxu0 %v115
  %v222 = vpop.f32.mrf.mxu0
  %v223 = vadd.f32 %v69, %v222
  %224 = vmatmul.f32.gmra.mxu0 %v118
  %v225 = vpop.f32.mrf.mxu0
  %v226 = vadd.f32 %v69, %v225
  %227 = vmatmul.f32.gmra.mxu0 %v121
  %v228 = vpop.f32.mrf.mxu0
  %v229 = vadd.f32 %v69, %v228
  %230 = vmatmul.f32.gmra.mxu0 %v124
  %v231 = vpop.f32.mrf.mxu0
  %v232 = vadd.f32 %v69, %v231
  %233 = vmatmul.f32.gmra.mxu0 %v127
  %v234 = vpop.f32.mrf.mxu0
  %v235 = vadd.f32 %v69, %v234
  %236 = vmatmul.f32.gmra.mxu0 %v130
  %v237 = vpop.f32.mrf.mxu0
  %v238 = vadd.f32 %v69, %v237
  %239 = vmatmul.f32.gmra.mxu0 %v133
  %v240 = vpop.f32.mrf.mxu0
  %v241 = vadd.f32 %v69, %v240
  %242 = vmatmul.f32.gmra.mxu0 %v136
  %v243 = vpop.f32.mrf.mxu0
  %v244 = vadd.f32 %v69, %v243
  %245 = vmatmul.f32.gmra.mxu0 %v139
  %v246 = vpop.f32.mrf.mxu0
  %v247 = vadd.f32 %v69, %v246
  %248 = vmatmul.f32.gmra.mxu0 %v142
  %v249 = vpop.f32.mrf.mxu0
  %v250 = vadd.f32 %v69, %v249
  %251 = vmatmul.f32.gmra.mxu0 %v145
  %v252 = vpop.f32.mrf.mxu0
  %v253 = vadd.f32 %v69, %v252
  %254 = vmatmul.f32.gmra.mxu0 %v148
  %v255 = vpop.f32.mrf.mxu0
  %v256 = vadd.f32 %v69, %v255
  %257 = vmatmul.f32.gmra.mxu0 %v151
  %v258 = vpop.f32.mrf.mxu0
  %v259 = vadd.f32 %v69, %v258
  %260 = vmatmul.f32.gmra.mxu0 %v154
  %v261 = vpop.f32.mrf.mxu0
  %v262 = vadd.f32 %v69, %v261
  %263 = vmatmul.f32.gmra.mxu0 %v157
  %v264 = vpop.f32.mrf.mxu0
  %v265 = vadd.f32 %v69, %v264
  %266 = vdwg.mxu0
  %v267 = vmax.f32 %v181, 0.0
  %v268 = vmax.f32 %v184, 0.0
  %v269 = vmax.f32 %v187, 0.0
  %v270 = vmax.f32 %v190, 0.0
  %v271 = vmax.f32 %v193, 0.0
  %v272 = vmax.f32 %v196, 0.0
  %v273 = vmax.f32 %v199, 0.0
  %v274 = vmax.f32 %v202, 0.0
  %v275 = vmax.f32 %v205, 0.0
  %v276 = vmax.f32 %v208, 0.0
  %v277 = vmax.f32 %v211, 0.0
  %v278 = vmax.f32 %v214, 0.0
  %v279 = vmax.f32 %v217, 0.0
  %v280 = vmax.f32 %v220, 0.0
  %v281 = vmax.f32 %v223, 0.0
  %v282 = vmax.f32 %v226, 0.0
  %v283 = vmax.f32 %v229, 0.0
  %v284 = vmax.f32 %v232, 0.0
  %v285 = vmax.f32 %v235, 0.0
  %v286 = vmax.f32 %v238, 0.0
  %v287 = vmax.f32 %v241, 0.0
  %v288 = vmax.f32 %v244, 0.0
  %v289 = vmax.f32 %v247, 0.0
  %v290 = vmax.f32 %v250, 0.0
  %v291 = vmax.f32 %v253, 0.0
  %v292 = vmax.f32 %v256, 0.0
  %v293 = vmax.f32 %v259, 0.0
  %v294 = vmax.f32 %v262, 0.0
  %v295 = vmax.f32 %v265, 0.0
  %296 = vst [vmem:[#allocation2] sm:$0xff] %v267
  %297 = vst [vmem:[#allocation2 + $0x8] sm:$0xff] %v268
  %298 = vst [vmem:[#allocation2 + $0x10] sm:$0xff] %v269
  %299 = vst [vmem:[#allocation2 + $0x18] sm:$0xff] %v270
  %300 = vst [vmem:[#allocation2 + $0x20] sm:$0xff] %v271
  %301 = vst [vmem:[#allocation2 + $0x28] sm:$0xff] %v272
  %302 = vst [vmem:[#allocation2 + $0x30] sm:$0xff] %v273
  %303 = vst [vmem:[#allocation2 + $0x38] sm:$0xff] %v274
  %304 = vst [vmem:[#allocation2 + $0x40] sm:$0xff] %v275
  %305 = vst [vmem:[#allocation2 + $0x48] sm:$0xff] %v276
  %306 = vst [vmem:[#allocation2 + $0x50] sm:$0xff] %v277
  %307 = vst [vmem:[#allocation2 + $0x58] sm:$0xff] %v278
  %308 = vst [vmem:[#allocation2 + $0x60] sm:$0xff] %v279
  %309 = vst [vmem:[#allocation2 + $0x68] sm:$0xff] %v280
  %310 = vst [vmem:[#allocation2 + $0x70] sm:$0xff] %v281
  %311 = vst [vmem:[#allocation2 + $0x78] sm:$0xff] %v282
  %312 = vst [vmem:[#allocation2 + $0x80] sm:$0xff] %v283
  %313 = vst [vmem:[#allocation2 + $0x88] sm:$0xff] %v284
  %314 = vst [vmem:[#allocation2 + $0x90] sm:$0xff] %v285
  %315 = vst [vmem:[#allocation2 + $0x98] sm:$0xff] %v286
  %316 = vst [vmem:[#allocation2 + $0xa0] sm:$0xff] %v287
  %317 = vst [vmem:[#allocation2 + $0xa8] sm:$0xff] %v288
  %318 = vst [vmem:[#allocation2 + $0xb0] sm:$0xff] %v289
  %319 = vst [vmem:[#allocation2 + $0xb8] sm:$0xff] %v290
  %320 = vst [vmem:[#allocation2 + $0xc0] sm:$0xff] %v291
  %321 = vst [vmem:[#allocation2 + $0xc8] sm:$0xff] %v292
  %322 = vst [vmem:[#allocation2 + $0xd0] sm:$0xff] %v293
  %323 = vst [vmem:[#allocation2 + $0xd8] sm:$0xff] %v294
  %324 = vst [vmem:[#allocation2 + $0xe0] sm:$0x3] %v295
  %v325 = vld [vmem:[#allocation2] ss:$2 sm:$0xff]
  %s326 = scalar_lea.vmem [#allocation2], 16
  %v327 = vld [vmem:[%s326] ss:$2 sm:$0xff]
  %s328 = scalar_lea.vmem [#allocation2], 32
  %v329 = vld [vmem:[%s328] ss:$2 sm:$0xff]
  %s330 = scalar_lea.vmem [#allocation2], 48
  %v331 = vld [vmem:[%s330] ss:$2 sm:$0xff]
  %s332 = scalar_lea.vmem [#allocation2], 1
  %v333 = vld [vmem:[%s332] ss:$2 sm:$0xff]
  %s334 = scalar_lea.vmem [#allocation2], 17
  %v335 = vld [vmem:[%s334] ss:$2 sm:$0xff]
  %s336 = scalar_lea.vmem [#allocation2], 33
  %v337 = vld [vmem:[%s336] ss:$2 sm:$0xff]
  %s338 = scalar_lea.vmem [#allocation2], 49
  %v339 = vld [vmem:[%s338] ss:$2 sm:$0xff]
  %v340 = vmax.f32 %v325, %v333
  %v341 = vmax.f32 %v327, %v335
  %v342 = vmax.f32 %v329, %v337
  %v343 = vmax.f32 %v331, %v339
  %s344 = scalar_lea.vmem [#allocation2], 2
  %v345 = vld [vmem:[%s344] ss:$2 sm:$0xff]
  %s346 = scalar_lea.vmem [#allocation2], 18
  %v347 = vld [vmem:[%s346] ss:$2 sm:$0xff]
  %s348 = scalar_lea.vmem [#allocation2], 34
  %v349 = vld [vmem:[%s348] ss:$2 sm:$0xff]
  %s350 = scalar_lea.vmem [#allocation2], 50
  %v351 = vld [vmem:[%s350] ss:$2 sm:$0xff]
  %v352 = vmax.f32 %v340, %v345
  %v353 = vmax.f32 %v341, %v347
  %v354 = vmax.f32 %v342, %v349
  %v355 = vmax.f32 %v343, %v351
  %356 = vst [vmem:[#allocation3] sm:$0xff] %v352
  %357 = vst [vmem:[#allocation3 + $0x18] sm:$0xff] %v353
  %358 = vst [vmem:[#allocation3 + $0x30] sm:$0xff] %v354
  %359 = vst [vmem:[#allocation3 + $0x48] sm:$0x3f] %v355
  %vm364 = vcmask 1046528
  %v365 = vrot.slane %v352, 1
  %v366 = vrot.slane %v353, 1
  %v367 = vsel %vm364, %v365, %v366
  %v368 = vrot.slane %v354, 1
  %v369 = vsel %vm364, %v366, %v368
  %v370 = vrot.slane %v355, 1
  %v371 = vsel %vm364, %v368, %v370
  %376 = vst [vmem:[#allocation3 + $0x8] sm:$0xff] %v367
  %377 = vst [vmem:[#allocation3 + $0x20] sm:$0xff] %v369
  %378 = vst [vmem:[#allocation3 + $0x38] sm:$0xff] %v371
  %379 = vst [vmem:[#allocation3 + $0x50] sm:$0x3f] %v370
  %vm380 = vcmask 1045504
  %v381 = vrot.slane %v352, 2
  %v382 = vrot.slane %v353, 2
  %v383 = vsel %vm380, %v381, %v382
  %v384 = vrot.slane %v354, 2
  %v385 = vsel %vm380, %v382, %v384
  %v386 = vrot.slane %v355, 2
  %v387 = vsel %vm380, %v384, %v386
  %392 = vst [vmem:[#allocation3 + $0x10] sm:$0xff] %v383
  %393 = vst [vmem:[#allocation3 + $0x28] sm:$0xff] %v385
  %394 = vst [vmem:[#allocation3 + $0x40] sm:$0xff] %v387
  %395 = vst [vmem:[#allocation3 + $0x58] sm:$0x3f] %v386
  %s396 = scalar_lea.vmem [#allocation2], 65
  %v397 = vld [vmem:[%s396] ss:$2 sm:$0xff]
  %s398 = scalar_lea.vmem [#allocation2], 81
  %v399 = vld [vmem:[%s398] ss:$2 sm:$0xff]
  %s400 = scalar_lea.vmem [#allocation2], 97
  %v401 = vld [vmem:[%s400] ss:$2 sm:$0xff]
  %s402 = scalar_lea.vmem [#allocation2], 113
  %v403 = vld [vmem:[%s402] ss:$2 sm:$0xff]
  %s404 = scalar_lea.vmem [#allocation2], 66
  %v405 = vld [vmem:[%s404] ss:$2 sm:$0xff]
  %s406 = scalar_lea.vmem [#allocation2], 82
  %v407 = vld [vmem:[%s406] ss:$2 sm:$0xff]
  %s408 = scalar_lea.vmem [#allocation2], 98
  %v409 = vld [vmem:[%s408] ss:$2 sm:$0xff]
  %s410 = scalar_lea.vmem [#allocation2], 114
  %v411 = vld [vmem:[%s410] ss:$2 sm:$0xff]
  %v412 = vmax.f32 %v397, %v405
  %v413 = vmax.f32 %v399, %v407
  %v414 = vmax.f32 %v401, %v409
  %v415 = vmax.f32 %v403, %v411
  %s416 = scalar_lea.vmem [#allocation2], 67
  %v417 = vld [vmem:[%s416] ss:$2 sm:$0xff]
  %s418 = scalar_lea.vmem [#allocation2], 83
  %v419 = vld [vmem:[%s418] ss:$2 sm:$0xff]
  %s420 = scalar_lea.vmem [#allocation2], 99
  %v421 = vld [vmem:[%s420] ss:$2 sm:$0xff]
  %s422 = scalar_lea.vmem [#allocation2], 115
  %v423 = vld [vmem:[%s422] ss:$2 sm:$0xff]
  %v424 = vmax.f32 %v412, %v417
  %v425 = vmax.f32 %v413, %v419
  %v426 = vmax.f32 %v414, %v421
  %v427 = vmax.f32 %v415, %v423
  %v432 = vrot.slane %v424, 2
  %v433 = vrot.slane %v425, 2
  %v434 = vsel %vm380, %v432, %v433
  %v435 = vrot.slane %v426, 2
  %v436 = vsel %vm380, %v433, %v435
  %v437 = vrot.slane %v427, 2
  %v438 = vsel %vm380, %v435, %v437
  %444 = vst [vmem:[#allocation3 + $0x48] sm:$0xc0] %v432
  %445 = vst [vmem:[#allocation3 + $0x60] sm:$0xff] %v434
  %446 = vst [vmem:[#allocation3 + $0x78] sm:$0xff] %v436
  %447 = vst [vmem:[#allocation3 + $0x90] sm:$0xff] %v438
  %448 = vst [vmem:[#allocation3 + $0xa8] sm:$0xf] %v437
  %vm449 = vcmask 1044480
  %v450 = vrot.slane %v424, 3
  %v451 = vrot.slane %v425, 3
  %v452 = vsel %vm449, %v450, %v451
  %v453 = vrot.slane %v426, 3
  %v454 = vsel %vm449, %v451, %v453
  %v455 = vrot.slane %v427, 3
  %v456 = vsel %vm449, %v453, %v455
  %462 = vst [vmem:[#allocation3 + $0x50] sm:$0xc0] %v450
  %463 = vst [vmem:[#allocation3 + $0x68] sm:$0xff] %v452
  %464 = vst [vmem:[#allocation3 + $0x80] sm:$0xff] %v454
  %465 = vst [vmem:[#allocation3 + $0x98] sm:$0xff] %v456
  %466 = vst [vmem:[#allocation3 + $0xb0] sm:$0xf] %v455
  %v467 = vrot.slane %v424, 4
  %v468 = vrot.slane %v425, 4
  %v469 = vsel %vm159, %v467, %v468
  %v470 = vrot.slane %v426, 4
  %v471 = vsel %vm159, %v468, %v470
  %v472 = vrot.slane %v427, 4
  %v473 = vsel %vm159, %v470, %v472
  %479 = vst [vmem:[#allocation3 + $0x58] sm:$0xc0] %v467
  %480 = vst [vmem:[#allocation3 + $0x70] sm:$0xff] %v469
  %481 = vst [vmem:[#allocation3 + $0x88] sm:$0xff] %v471
  %482 = vst [vmem:[#allocation3 + $0xa0] sm:$0xff] %v473
  %483 = vst [vmem:[#allocation3 + $0xb8] sm:$0xf] %v472
  %s484 = scalar_lea.vmem [#allocation2], 130
  %v485 = vld [vmem:[%s484] ss:$2 sm:$0xff]
  %s486 = scalar_lea.vmem [#allocation2], 146
  %v487 = vld [vmem:[%s486] ss:$2 sm:$0xff]
  %s488 = scalar_lea.vmem [#allocation2], 162
  %v489 = vld [vmem:[%s488] ss:$2 sm:$0x7f]
  %s490 = scalar_lea.vmem [#allocation2], 131
  %v491 = vld [vmem:[%s490] ss:$2 sm:$0xff]
  %s492 = scalar_lea.vmem [#allocation2], 147
  %v493 = vld [vmem:[%s492] ss:$2 sm:$0xff]
  %s494 = scalar_lea.vmem [#allocation2], 163
  %v495 = vld [vmem:[%s494] ss:$2 sm:$0x7f]
  %v496 = vmax.f32 %v485, %v491
  %v497 = vmax.f32 %v487, %v493
  %v498 = vmax.f32 %v489, %v495
  %s499 = scalar_lea.vmem [#allocation2], 132
  %v500 = vld [vmem:[%s499] ss:$2 sm:$0xff]
  %s501 = scalar_lea.vmem [#allocation2], 148
  %v502 = vld [vmem:[%s501] ss:$2 sm:$0xff]
  %s503 = scalar_lea.vmem [#allocation2], 164
  %v504 = vld [vmem:[%s503] ss:$2 sm:$0x7f]
  %v505 = vmax.f32 %v496, %v500
  %v506 = vmax.f32 %v497, %v502
  %v507 = vmax.f32 %v498, %v504
  %v511 = vrot.slane %v505, 4
  %v512 = vrot.slane %v506, 4
  %v513 = vsel %vm159, %v511, %v512
  %v514 = vrot.slane %v507, 4
  %v515 = vsel %vm159, %v512, %v514
  %520 = vst [vmem:[#allocation3 + $0xa8] sm:$0xf0] %v511
  %521 = vst [vmem:[#allocation3 + $0xc0] sm:$0xff] %v513
  %522 = vst [vmem:[#allocation3 + $0xd8] sm:$0xff] %v515
  %523 = vst [vmem:[#allocation3 + $0xf0] sm:$0x1] %v514
  %vm524 = vcmask 1042432
  %v525 = vrot.slane %v505, 5
  %v526 = vrot.slane %v506, 5
  %v527 = vsel %vm524, %v525, %v526
  %v528 = vrot.slane %v507, 5
  %v529 = vsel %vm524, %v526, %v528
  %534 = vst [vmem:[#allocation3 + $0xb0] sm:$0xf0] %v525
  %535 = vst [vmem:[#allocation3 + $0xc8] sm:$0xff] %v527
  %536 = vst [vmem:[#allocation3 + $0xe0] sm:$0xff] %v529
  %537 = vst [vmem:[#allocation3 + $0xf8] sm:$0x1] %v528
  %vm538 = vcmask 1041408
  %v539 = vrot.slane %v505, 6
  %v540 = vrot.slane %v506, 6
  %v541 = vsel %vm538, %v539, %v540
  %v542 = vrot.slane %v507, 6
  %v543 = vsel %vm538, %v540, %v542
  %548 = vst [vmem:[#allocation3 + $0xb8] sm:$0xf0] %v539
  %549 = vst [vmem:[#allocation3 + $0xd0] sm:$0xff] %v541
  %550 = vst [vmem:[#allocation3 + $0xe8] sm:$0xff] %v543
  %551 = vst [vmem:[#allocation3 + $0x100] sm:$0x1] %v542
  %s552 = scalar_lea.vmem [#allocation2], 178
  %v553 = vld [vmem:[%s552] ss:$2 sm:$0xff]
  %s554 = scalar_lea.vmem [#allocation2], 194
  %v555 = vld [vmem:[%s554] ss:$2 sm:$0xff]
  %s556 = scalar_lea.vmem [#allocation2], 210
  %v557 = vld [vmem:[%s556] ss:$2 sm:$0x7f]
  %s558 = scalar_lea.vmem [#allocation2], 179
  %v559 = vld [vmem:[%s558] ss:$2 sm:$0xff]
  %s560 = scalar_lea.vmem [#allocation2], 195
  %v561 = vld [vmem:[%s560] ss:$2 sm:$0xff]
  %s562 = scalar_lea.vmem [#allocation2], 211
  %v563 = vld [vmem:[%s562] ss:$2 sm:$0x7f]
  %v564 = vmax.f32 %v553, %v559
  %v565 = vmax.f32 %v555, %v561
  %v566 = vmax.f32 %v557, %v563
  %s567 = scalar_lea.vmem [#allocation2], 180
  %v568 = vld [vmem:[%s567] ss:$2 sm:$0xff]
  %s569 = scalar_lea.vmem [#allocation2], 196
  %v570 = vld [vmem:[%s569] ss:$2 sm:$0xff]
  %s571 = scalar_lea.vmem [#allocation2], 212
  %v572 = vld [vmem:[%s571] ss:$2 sm:$0x7f]
  %v573 = vmax.f32 %v564, %v568
  %v574 = vmax.f32 %v565, %v570
  %v575 = vmax.f32 %v566, %v572
  %vm579 = vcmask 1040384
  %v580 = vrot.slane %v573, 7
  %v581 = vrot.slane %v574, 7
  %v582 = vsel %vm579, %v580, %v581
  %v583 = vrot.slane %v575, 7
  %v584 = vsel %vm579, %v581, %v583
  %588 = vst [vmem:[#allocation3 + $0xf0] sm:$0xfe] %v580
  %589 = vst [vmem:[#allocation3 + $0x108] sm:$0xff] %v582
  %590 = vst [vmem:[#allocation3 + $0x120] sm:$0x3f] %v584
  %591 = vst [vmem:[#allocation3 + $0xf8] sm:$0xfe] %v573
  %592 = vst [vmem:[#allocation3 + $0x110] sm:$0xff] %v574
  %593 = vst [vmem:[#allocation3 + $0x128] sm:$0x3f] %v575
  %v594 = vrot.slane %v573, 1
  %v595 = vrot.slane %v574, 1
  %v596 = vsel %vm364, %v594, %v595
  %v597 = vrot.slane %v575, 1
  %v598 = vsel %vm364, %v595, %v597
  %602 = vst [vmem:[#allocation3 + $0x100] sm:$0xfe] %v596
  %603 = vst [vmem:[#allocation3 + $0x118] sm:$0xff] %v598
  %604 = vst [vmem:[#allocation3 + $0x130] sm:$0x3f] %v597
  %v605 = vld [vmem:[#allocation3] sm:$0xff]
  %v606 = vld [vmem:[#allocation3 + $0x8] sm:$0xff]
  %v607 = vld [vmem:[#allocation3 + $0x10] sm:$0xff]
  %v608 = vld [vmem:[#allocation3 + $0x18] sm:$0xff]
  %v609 = vld [vmem:[#allocation3 + $0x20] sm:$0xff]
  %v610 = vld [vmem:[#allocation3 + $0x28] sm:$0xff]
  %v611 = vld [vmem:[#allocation3 + $0x30] sm:$0xff]
  %v612 = vld [vmem:[#allocation3 + $0x38] sm:$0xff]
  %v613 = vld [vmem:[#allocation3 + $0x40] sm:$0xff]
  %v614 = vld [vmem:[#allocation3 + $0x48] sm:$0xff]
  %v615 = vld [vmem:[#allocation3 + $0x50] sm:$0xff]
  %v616 = vld [vmem:[#allocation3 + $0x58] sm:$0xff]
  %v617 = vld [vmem:[#allocation3 + $0x60] sm:$0xff]
  %v618 = vld [vmem:[#allocation3 + $0x68] sm:$0xff]
  %v619 = vld [vmem:[#allocation3 + $0x70] sm:$0xff]
  %v620 = vld [vmem:[#allocation3 + $0x78] sm:$0xff]
  %v621 = vld [vmem:[#allocation3 + $0x80] sm:$0xff]
  %v622 = vld [vmem:[#allocation3 + $0x88] sm:$0xff]
  %v623 = vld [vmem:[#allocation3 + $0x90] sm:$0xff]
  %v624 = vld [vmem:[#allocation3 + $0x98] sm:$0xff]
  %v625 = vld [vmem:[#allocation3 + $0xa0] sm:$0xff]
  %v626 = vld [vmem:[#allocation3 + $0xa8] sm:$0xff]
  %v627 = vld [vmem:[#allocation3 + $0xb0] sm:$0xff]
  %v628 = vld [vmem:[#allocation3 + $0xb8] sm:$0xff]
  %v629 = vld [vmem:[#allocation3 + $0xc0] sm:$0xff]
  %v630 = vld [vmem:[#allocation3 + $0xc8] sm:$0xff]
  %v631 = vld [vmem:[#allocation3 + $0xd0] sm:$0xff]
  %v632 = vld [vmem:[#allocation3 + $0xd8] sm:$0xff]
  %v633 = vld [vmem:[#allocation3 + $0xe0] sm:$0xff]
  %v634 = vld [vmem:[#allocation3 + $0xe8] sm:$0xff]
  %v635 = vld [vmem:[#allocation3 + $0xf0] sm:$0xff]
  %v636 = vld [vmem:[#allocation3 + $0xf8] sm:$0xff]
  %v637 = vld [vmem:[#allocation3 + $0x100] sm:$0xff]
  %v638 = vld [vmem:[#allocation3 + $0x108] sm:$0xff]
  %v639 = vld [vmem:[#allocation3 + $0x110] sm:$0xff]
  %v640 = vld [vmem:[#allocation3 + $0x118] sm:$0xff]
  %v641 = vld [vmem:[#allocation3 + $0x120] sm:$0x3f]
  %v642 = vld [vmem:[#allocation3 + $0x128] sm:$0x3f]
  %v643 = vld [vmem:[#allocation3 + $0x130] sm:$0x3f]
  %v644 = vld [vmem:[%s3] sm:$0xff]
  %v645 = vld [vmem:[%s3 + $0x8] sm:$0xff]
  %v646 = vld [vmem:[%s3 + $0x10] sm:$0xff]
  %v647 = vld [vmem:[%s3 + $0x18] sm:$0xff]
  %v648 = vld [vmem:[%s3 + $0x20] sm:$0xff]
  %v649 = vld [vmem:[%s3 + $0x28] sm:$0xff]
  %v650 = vld [vmem:[%s3 + $0x30] sm:$0xff]
  %v651 = vld [vmem:[%s3 + $0x38] sm:$0xff]
  %v652 = vld [vmem:[%s3 + $0x40] sm:$0xff]
  %v653 = vld [vmem:[%s3 + $0x48] sm:$0xff]
  %v654 = vld [vmem:[%s3 + $0x50] sm:$0xff]
  %v655 = vld [vmem:[%s3 + $0x58] sm:$0xff]
  %v656 = vld [vmem:[%s3 + $0x60] sm:$0xff]
  %v657 = vld [vmem:[%s3 + $0x68] sm:$0xff]
  %v658 = vld [vmem:[%s3 + $0x70] sm:$0xff]
  %v659 = vld [vmem:[%s3 + $0x78] sm:$0xff]
  %v660 = vld [vmem:[%s3 + $0x80] sm:$0xff]
  %v661 = vld [vmem:[%s3 + $0x88] sm:$0xff]
  %v662 = vld [vmem:[%s3 + $0x90] sm:$0xff]
  %v663 = vld [vmem:[%s3 + $0x98] sm:$0xff]
  %v664 = vld [vmem:[%s3 + $0xa0] sm:$0xff]
  %v665 = vld [vmem:[%s3 + $0xa8] sm:$0xff]
  %v666 = vld [vmem:[%s3 + $0xb0] sm:$0xff]
  %v667 = vld [vmem:[%s3 + $0xb8] sm:$0xff]
  %v668 = vld [vmem:[%s3 + $0xc0] sm:$0xff]
  %v669 = vld [vmem:[%s3 + $0xc8] sm:$0xff]
  %v670 = vld [vmem:[%s3 + $0xd0] sm:$0xff]
  %v671 = vld [vmem:[%s3 + $0xd8] sm:$0xff]
  %v672 = vld [vmem:[%s3 + $0xe0] sm:$0xff]
  %v673 = vld [vmem:[%s3 + $0xe8] sm:$0xff]
  %v674 = vld [vmem:[%s3 + $0xf0] sm:$0xff]
  %v675 = vld [vmem:[%s3 + $0xf8] sm:$0xff]
  %v676 = vld [vmem:[%s3 + $0x100] sm:$0xff]
  %v677 = vld [vmem:[%s3 + $0x108] sm:$0xff]
  %v678 = vld [vmem:[%s3 + $0x110] sm:$0xff]
  %v679 = vld [vmem:[%s3 + $0x118] sm:$0xff]
  %v680 = vld [vmem:[%s3 + $0x120] sm:$0xff]
  %v681 = vld [vmem:[%s3 + $0x128] sm:$0xff]
  %v682 = vld [vmem:[%s3 + $0x130] sm:$0xff]
  %v683 = vld [vmem:[%s3 + $0x138] sm:$0xff]
  %v684 = vld [vmem:[%s3 + $0x140] sm:$0xff]
  %v685 = vld [vmem:[%s3 + $0x148] sm:$0xff]
  %v686 = vld [vmem:[%s3 + $0x150] sm:$0xff]
  %v687 = vld [vmem:[%s3 + $0x158] sm:$0xff]
  %v688 = vld [vmem:[%s3 + $0x160] sm:$0xff]
  %v689 = vld [vmem:[%s3 + $0x168] sm:$0xff]
  %v690 = vld [vmem:[%s3 + $0x170] sm:$0xff]
  %v691 = vld [vmem:[%s3 + $0x178] sm:$0xff]
  %v692 = vld [vmem:[%s4] sm:$0x1]
  %v694 = vperm.slane %v692, 0
  %696 = vmatpush.msra.mxu0 %v659
  %697 = vmatpush.msra.mxu0 %v658
  %698 = vmatpush.msra.mxu0 %v657
  %699 = vmatpush.msra.mxu0 %v656
  %700 = vmatpush.msra.mxu0 %v655
  %701 = vmatpush.msra.mxu0 %v654
  %702 = vmatpush.msra.mxu0 %v653
  %703 = vmatpush.msra.mxu0 %v652
  %704 = vmatpush.msra.mxu0 %v651
  %705 = vmatpush.msra.mxu0 %v650
  %706 = vmatpush.msra.mxu0 %v649
  %707 = vmatpush.msra.mxu0 %v648
  %708 = vmatpush.msra.mxu0 %v647
  %709 = vmatpush.msra.mxu0 %v646
  %710 = vmatpush.msra.mxu0 %v645
  %711 = vmatpush.msra.mxu0 %v644
  %712 = vmatmul.f32.gmra.mxu0 %v605
  %v713 = vpop.f32.mrf.mxu0
  %v714 = vadd.f32 %v694, %v713
  %715 = vmatmul.f32.gmra.mxu0 %v608
  %v716 = vpop.f32.mrf.mxu0
  %v717 = vadd.f32 %v694, %v716
  %718 = vmatmul.f32.gmra.mxu0 %v611
  %v719 = vpop.f32.mrf.mxu0
  %v720 = vadd.f32 %v694, %v719
  %721 = vmatmul.f32.gmra.mxu0 %v614
  %v722 = vpop.f32.mrf.mxu0
  %v723 = vadd.f32 %v694, %v722
  %724 = vmatmul.f32.gmra.mxu0 %v617
  %v725 = vpop.f32.mrf.mxu0
  %v726 = vadd.f32 %v694, %v725
  %727 = vmatmul.f32.gmra.mxu0 %v620
  %v728 = vpop.f32.mrf.mxu0
  %v729 = vadd.f32 %v694, %v728
  %730 = vmatmul.f32.gmra.mxu0 %v623
  %v731 = vpop.f32.mrf.mxu0
  %v732 = vadd.f32 %v694, %v731
  %733 = vmatmul.f32.gmra.mxu0 %v626
  %v734 = vpop.f32.mrf.mxu0
  %v735 = vadd.f32 %v694, %v734
  %736 = vmatmul.f32.gmra.mxu0 %v629
  %v737 = vpop.f32.mrf.mxu0
  %v738 = vadd.f32 %v694, %v737
  %739 = vmatmul.f32.gmra.mxu0 %v632
  %v740 = vpop.f32.mrf.mxu0
  %v741 = vadd.f32 %v694, %v740
  %742 = vmatmul.f32.gmra.mxu0 %v635
  %v743 = vpop.f32.mrf.mxu0
  %v744 = vadd.f32 %v694, %v743
  %745 = vmatmul.f32.gmra.mxu0 %v638
  %v746 = vpop.f32.mrf.mxu0
  %v747 = vadd.f32 %v694, %v746
  %748 = vmatmul.f32.gmra.mxu0 %v641
  %v749 = vpop.f32.mrf.mxu0
  %v750 = vadd.f32 %v694, %v749
  %751 = vdwg.mxu0
  %752 = vmatpush.msra.mxu0 %v675
  %753 = vmatpush.msra.mxu0 %v674
  %754 = vmatpush.msra.mxu0 %v673
  %755 = vmatpush.msra.mxu0 %v672
  %756 = vmatpush.msra.mxu0 %v671
  %757 = vmatpush.msra.mxu0 %v670
  %758 = vmatpush.msra.mxu0 %v669
  %759 = vmatpush.msra.mxu0 %v668
  %760 = vmatpush.msra.mxu0 %v667
  %761 = vmatpush.msra.mxu0 %v666
  %762 = vmatpush.msra.mxu0 %v665
  %763 = vmatpush.msra.mxu0 %v664
  %764 = vmatpush.msra.mxu0 %v663
  %765 = vmatpush.msra.mxu0 %v662
  %766 = vmatpush.msra.mxu0 %v661
  %767 = vmatpush.msra.mxu0 %v660
  %768 = vmatmul.f32.gmra.mxu0 %v606
  %v769 = vpop.f32.mrf.mxu0
  %v770 = vadd.f32 %v714, %v769
  %771 = vmatmul.f32.gmra.mxu0 %v609
  %v772 = vpop.f32.mrf.mxu0
  %v773 = vadd.f32 %v717, %v772
  %774 = vmatmul.f32.gmra.mxu0 %v612
  %v775 = vpop.f32.mrf.mxu0
  %v776 = vadd.f32 %v720, %v775
  %777 = vmatmul.f32.gmra.mxu0 %v615
  %v778 = vpop.f32.mrf.mxu0
  %v779 = vadd.f32 %v723, %v778
  %780 = vmatmul.f32.gmra.mxu0 %v618
  %v781 = vpop.f32.mrf.mxu0
  %v782 = vadd.f32 %v726, %v781
  %783 = vmatmul.f32.gmra.mxu0 %v621
  %v784 = vpop.f32.mrf.mxu0
  %v785 = vadd.f32 %v729, %v784
  %786 = vmatmul.f32.gmra.mxu0 %v624
  %v787 = vpop.f32.mrf.mxu0
  %v788 = vadd.f32 %v732, %v787
  %789 = vmatmul.f32.gmra.mxu0 %v627
  %v790 = vpop.f32.mrf.mxu0
  %v791 = vadd.f32 %v735, %v790
  %792 = vmatmul.f32.gmra.mxu0 %v630
  %v793 = vpop.f32.mrf.mxu0
  %v794 = vadd.f32 %v738, %v793
  %795 = vmatmul.f32.gmra.mxu0 %v633
  %v796 = vpop.f32.mrf.mxu0
  %v797 = vadd.f32 %v741, %v796
  %798 = vmatmul.f32.gmra.mxu0 %v636
  %v799 = vpop.f32.mrf.mxu0
  %v800 = vadd.f32 %v744, %v799
  %801 = vmatmul.f32.gmra.mxu0 %v639
  %v802 = vpop.f32.mrf.mxu0
  %v803 = vadd.f32 %v747, %v802
  %804 = vmatmul.f32.gmra.mxu0 %v642
  %v805 = vpop.f32.mrf.mxu0
  %v806 = vadd.f32 %v750, %v805
  %807 = vdwg.mxu0
  %808 = vmatpush.msra.mxu0 %v691
  %809 = vmatpush.msra.mxu0 %v690
  %810 = vmatpush.msra.mxu0 %v689
  %811 = vmatpush.msra.mxu0 %v688
  %812 = vmatpush.msra.mxu0 %v687
  %813 = vmatpush.msra.mxu0 %v686
  %814 = vmatpush.msra.mxu0 %v685
  %815 = vmatpush.msra.mxu0 %v684
  %816 = vmatpush.msra.mxu0 %v683
  %817 = vmatpush.msra.mxu0 %v682
  %818 = vmatpush.msra.mxu0 %v681
  %819 = vmatpush.msra.mxu0 %v680
  %820 = vmatpush.msra.mxu0 %v679
  %821 = vmatpush.msra.mxu0 %v678
  %822 = vmatpush.msra.mxu0 %v677
  %823 = vmatpush.msra.mxu0 %v676
  %824 = vmatmul.f32.gmra.mxu0 %v607
  %v825 = vpop.f32.mrf.mxu0
  %v826 = vadd.f32 %v770, %v825
  %827 = vmatmul.f32.gmra.mxu0 %v610
  %v828 = vpop.f32.mrf.mxu0
  %v829 = vadd.f32 %v773, %v828
  %830 = vmatmul.f32.gmra.mxu0 %v613
  %v831 = vpop.f32.mrf.mxu0
  %v832 = vadd.f32 %v776, %v831
  %833 = vmatmul.f32.gmra.mxu0 %v616
  %v834 = vpop.f32.mrf.mxu0
  %v835 = vadd.f32 %v779, %v834
  %836 = vmatmul.f32.gmra.mxu0 %v619
  %v837 = vpop.f32.mrf.mxu0
  %v838 = vadd.f32 %v782, %v837
  %839 = vmatmul.f32.gmra.mxu0 %v622
  %v840 = vpop.f32.mrf.mxu0
  %v841 = vadd.f32 %v785, %v840
  %842 = vmatmul.f32.gmra.mxu0 %v625
  %v843 = vpop.f32.mrf.mxu0
  %v844 = vadd.f32 %v788, %v843
  %845 = vmatmul.f32.gmra.mxu0 %v628
  %v846 = vpop.f32.mrf.mxu0
  %v847 = vadd.f32 %v791, %v846
  %848 = vmatmul.f32.gmra.mxu0 %v631
  %v849 = vpop.f32.mrf.mxu0
  %v850 = vadd.f32 %v794, %v849
  %851 = vmatmul.f32.gmra.mxu0 %v634
  %v852 = vpop.f32.mrf.mxu0
  %v853 = vadd.f32 %v797, %v852
  %854 = vmatmul.f32.gmra.mxu0 %v637
  %v855 = vpop.f32.mrf.mxu0
  %v856 = vadd.f32 %v800, %v855
  %857 = vmatmul.f32.gmra.mxu0 %v640
  %v858 = vpop.f32.mrf.mxu0
  %v859 = vadd.f32 %v803, %v858
  %860 = vmatmul.f32.gmra.mxu0 %v643
  %v861 = vpop.f32.mrf.mxu0
  %v862 = vadd.f32 %v806, %v861
  %863 = vdwg.mxu0
  %864 = vst [vmem:[#allocation4] sm:$0xff] %v826
  %865 = vst [vmem:[#allocation4 + $0x8] sm:$0xff] %v829
  %866 = vst [vmem:[#allocation4 + $0x10] sm:$0xff] %v832
  %867 = vst [vmem:[#allocation4 + $0x18] sm:$0xff] %v835
  %868 = vst [vmem:[#allocation4 + $0x20] sm:$0xff] %v838
  %869 = vst [vmem:[#allocation4 + $0x28] sm:$0xff] %v841
  %870 = vst [vmem:[#allocation4 + $0x30] sm:$0xff] %v844
  %871 = vst [vmem:[#allocation4 + $0x38] sm:$0xff] %v847
  %872 = vst [vmem:[#allocation4 + $0x40] sm:$0xff] %v850
  %873 = vst [vmem:[#allocation4 + $0x48] sm:$0xff] %v853
  %874 = vst [vmem:[#allocation4 + $0x50] sm:$0xff] %v856
  %875 = vst [vmem:[#allocation4 + $0x58] sm:$0xff] %v859
  %876 = vst [vmem:[#allocation4 + $0x60] sm:$0x3f] %v862
  %v877 = vld [vmem:[#allocation4] ss:$2 sm:$0xff]
  %s878 = scalar_lea.vmem [#allocation4], 16
  %v879 = vld [vmem:[%s878] ss:$2 sm:$0x7f]
  %s880 = scalar_lea.vmem [#allocation4], 1
  %v881 = vld [vmem:[%s880] ss:$2 sm:$0xff]
  %s882 = scalar_lea.vmem [#allocation4], 17
  %v883 = vld [vmem:[%s882] ss:$2 sm:$0x7f]
  %v884 = vmax.f32 %v877, %v881
  %v885 = vmax.f32 %v879, %v883
  %s886 = scalar_lea.vmem [#allocation4], 30
  %v887 = vld [vmem:[%s886] ss:$2 sm:$0xff]
  %s888 = scalar_lea.vmem [#allocation4], 46
  %v889 = vld [vmem:[%s888] ss:$2 sm:$0x7f]
  %s890 = scalar_lea.vmem [#allocation4], 31
  %v891 = vld [vmem:[%s890] ss:$2 sm:$0xff]
  %s892 = scalar_lea.vmem [#allocation4], 47
  %v893 = vld [vmem:[%s892] ss:$2 sm:$0x7f]
  %v894 = vmax.f32 %v887, %v891
  %v895 = vmax.f32 %v889, %v893
  %s896 = scalar_lea.vmem [#allocation4], 60
  %v897 = vld [vmem:[%s896] ss:$2 sm:$0xff]
  %s898 = scalar_lea.vmem [#allocation4], 76
  %v899 = vld [vmem:[%s898] ss:$2 sm:$0x3]
  %s900 = scalar_lea.vmem [#allocation4], 61
  %v901 = vld [vmem:[%s900] ss:$2 sm:$0xff]
  %s902 = scalar_lea.vmem [#allocation4], 77
  %v903 = vld [vmem:[%s902] ss:$2 sm:$0x3]
  %v904 = vmax.f32 %v897, %v901
  %v905 = vmax.f32 %v899, %v903
  %s906 = scalar_lea.vmem [#allocation4], 81
  %v907 = vld [vmem:[%s906] ss:$2 sm:$0xff]
  %s908 = scalar_lea.vmem [#allocation4], 97
  %v909 = vld [vmem:[%s908] ss:$2 sm:$0x3]
  %s910 = scalar_lea.vmem [#allocation4], 82
  %v911 = vld [vmem:[%s910] ss:$2 sm:$0xff]
  %s912 = scalar_lea.vmem [#allocation4], 98
  %v913 = vld [vmem:[%s912] ss:$2 sm:$0x3]
  %v914 = vmax.f32 %v907, %v911
  %v915 = vmax.f32 %v909, %v913
  %v916 = vld [vmem:[%s5] sm:$0xff]
  %v917 = vld [vmem:[%s5 + $0x8] sm:$0x7f]
  %v918 = vld [vmem:[%s6] sm:$0xff]
  %v919 = vld [vmem:[%s6 + $0x8] sm:$0x3]
  %v920 = vmul.f32 %v884, %v916
  %v921 = vmul.f32 %v885, %v917
  %v922 = vsel %vm364, %v921, 0.0
  %v923 = vadd.f32 %v920, %v922
  %v924 = vrot.slane %v923, 4
  %v925 = vadd.f32 %v923, %v924
  %v926 = vrot.slane %v925, 2
  %v927 = vadd.f32 %v925, %v926
  %v928 = vrot.slane %v927, 1
  %v929 = vadd.f32 %v927, %v928
  %930 = vadd.xlane.f32.xlu0 %v929
  %v931 = vpop.xlane.xlu0 %930
  %v932 = vld [vmem:[#allocation5] sm:$0x1]
  %v933 = vadd.f32 %v931, %v932
  %v934 = vmul.f32 %v904, %v918
  %v935 = vmul.f32 %v905, %v919
  %v936 = vsel %vm538, %v935, 0.0
  %v937 = vadd.f32 %v934, %v936
  %v938 = vrot.slane %v937, 4
  %v939 = vadd.f32 %v937, %v938
  %v940 = vrot.slane %v939, 2
  %v941 = vadd.f32 %v939, %v940
  %v942 = vrot.slane %v941, 1
  %v943 = vadd.f32 %v941, %v942
  %944 = vadd.xlane.f32.xlu0 %v943
  %v945 = vpop.xlane.xlu0 %944
  %v946 = vld [vmem:[#allocation6] sm:$0x1]
  %v947 = vadd.f32 %v945, %v946
  %v948 = vmul.f32 %v933, %v947
  %v949 = vand.u32 2147483647, %v948
  %v950 = vsub.f32 0.0, %v949
  %v951 = vmul.f32 %v950, 1.442695
  %v952 = vpow.pop %v951
  %v953 = vadd.f32 %v952, 1.0
  %v954 = vrcp.pop %v953
  %v955 = vmul.f32 %v953, %v954
  %v956 = vsub.f32 1.0, %v955
  %v957 = vmul.f32 %v954, %v956
  %v958 = vadd.f32 %v954, %v957
  %vm959 = vweird.f32 %v953
  %vm960 = vweird.f32 %v954
  %vm961 = vmor %vm959, %vm960
  %v962 = vsel %vm961, %v954, %v958
  %v963 = vand.u32 2147483647, %v953
  %vm964 = vcmp.eq.f32.partialorder %v963, 8.507059e+37
  %v965 = vand.u32 %v953, 2147483648
  %v966 = vor.u32 1.1754944e-38, %v965
  %v967 = vsel %vm964, %v966, %v962
  %v968 = vmul.f32 1.0, %v967
  %vm969 = vcmp.ge.f32.partialorder %v948, 0.0
  %v970 = vsub.f32 1.0, %v968
  %v971 = vsel %vm969, %v968, %v970
  %vm972 = vcmask 0
  %973 = vst.msk [vmem:[%s9] sm:$0x1] %vm972, %v971
  %v974 = vmul.f32 %v894, %v916
  %v975 = vmul.f32 %v895, %v917
  %v976 = vsel %vm364, %v975, 0.0
  %v977 = vadd.f32 %v974, %v976
  %v978 = vrot.slane %v977, 4
  %v979 = vadd.f32 %v977, %v978
  %v980 = vrot.slane %v979, 2
  %v981 = vadd.f32 %v979, %v980
  %v982 = vrot.slane %v981, 1
  %v983 = vadd.f32 %v981, %v982
  %984 = vadd.xlane.f32.xlu0 %v983
  %v985 = vpop.xlane.xlu0 %984
  %v986 = vld [vmem:[#allocation5] sm:$0x1]
  %v987 = vadd.f32 %v985, %v986
  %v988 = vmul.f32 %v914, %v918
  %v989 = vmul.f32 %v915, %v919
  %v990 = vsel %vm538, %v989, 0.0
  %v991 = vadd.f32 %v988, %v990
  %v992 = vrot.slane %v991, 4
  %v993 = vadd.f32 %v991, %v992
  %v994 = vrot.slane %v993, 2
  %v995 = vadd.f32 %v993, %v994
  %v996 = vrot.slane %v995, 1
  %v997 = vadd.f32 %v995, %v996
  %998 = vadd.xlane.f32.xlu0 %v997
  %v999 = vpop.xlane.xlu0 %998
  %v1000 = vld [vmem:[#allocation6] sm:$0x1]
  %v1001 = vadd.f32 %v999, %v1000
  %v1002 = vmul.f32 %v987, %v1001
  %v1003 = vand.u32 2147483647, %v1002
  %v1004 = vsub.f32 0.0, %v1003
  %v1005 = vmul.f32 %v1004, 1.442695
  %v1006 = vpow.pop %v1005
  %v1007 = vadd.f32 %v1006, 1.0
  %v1008 = vrcp.pop %v1007
  %v1009 = vmul.f32 %v1007, %v1008
  %v1010 = vsub.f32 1.0, %v1009
  %v1011 = vmul.f32 %v1008, %v1010
  %v1012 = vadd.f32 %v1008, %v1011
  %vm1013 = vweird.f32 %v1007
  %vm1014 = vweird.f32 %v1008
  %vm1015 = vmor %vm1013, %vm1014
  %v1016 = vsel %vm1015, %v1008, %v1012
  %v1017 = vand.u32 2147483647, %v1007
  %vm1018 = vcmp.eq.f32.partialorder %v1017, 8.507059e+37
  %v1019 = vand.u32 %v1007, 2147483648
  %v1020 = vor.u32 1.1754944e-38, %v1019
  %v1021 = vsel %vm1018, %v1020, %v1016
  %v1022 = vmul.f32 1.0, %v1021
  %vm1023 = vcmp.ge.f32.partialorder %v1002, 0.0
  %v1024 = vsub.f32 1.0, %v1022
  %v1025 = vsel %vm1023, %v1022, %v1024
  %1026 = vst.msk [vmem:[%s9 + $0x1] sm:$0x1] %vm972, %v1025
  // Predicated region
  $region38: #{conv_forward.1} parent=0 // pred_check
    _
  $region39: #{conv_forward.1} parent=0 // pred_check_branch
    %1028 = sbr.rel (0) target = $region41
  $region40: #{conv_forward.1} parent=0 // pred_region
    _
  $region41: #{conv_forward.1} parent=0 // pred_fallthru
    _
  // Predicated region
  $region42: #{conv_forward.1} parent=0 // pred_check
    _
  $region43: #{conv_forward.1} parent=0 // pred_check_branch
    %1030 = sbr.rel (0) target = $region45
  $region44: #{conv_forward.1} parent=0 // pred_region
    _
  $region45: #{conv_forward.1} parent=0 // pred_fallthru
    _

</llo_original>
